<compile_context>
chip_gen: v5e
topology: v5e:2x2
jax: 0.10.0
libtpu: 0.0.40
codegen_flags: <defaults>
</compile_context>

<pallas_src>
import math
import functools

import jax
import jax.numpy as jnp
from jax.experimental import pallas as pl
from jax.experimental.pallas import tpu as pltpu

NEG_INF = -1e30  # large finite negative: exp(NEG_INF - max) underflows to 0, never NaN


def _tile(dim: int, pref: int) -> int:
    """Tile size: `pref` if it divides `dim`, else the full dim (safe fallback)."""
    if dim <= pref:
        return dim
    return pref if dim % pref == 0 else dim


# ----------------------------------------------------------------------------
# Tiled linear kernel (optional bias / ReLU), K-accumulated
# ----------------------------------------------------------------------------

def _linear_kernel(*refs, relu: bool, has_bias: bool):
    if has_bias:
        x_ref, w_ref, b_ref, o_ref, acc_ref = refs
    else:
        x_ref, w_ref, o_ref, acc_ref = refs
        b_ref = None
    k = pl.program_id(2)

    @pl.when(k == 0)
    def _():
        acc_ref[...] = jnp.zeros_like(acc_ref)

    acc_ref[...] += jnp.dot(x_ref[...], w_ref[...],
                            preferred_element_type=jnp.float32)

    @pl.when(k == pl.num_programs(2) - 1)
    def _():
        y = acc_ref[...]
        if has_bias:
            y = y + b_ref[...]
        if relu:
            y = jnp.maximum(y, 0.0)
        o_ref[...] = y.astype(o_ref.dtype)


def linear_pallas(x, w, b=None, relu=False, tm=256, tn=512, tk=512):
    """y = x @ w (+ b) (+ ReLU). x:[M,K], w:[K,N], b:[N] or None."""
    M, K = x.shape
    N = w.shape[1]
    tm, tn, tk = _tile(M, tm), _tile(N, tn), _tile(K, tk)
    has_bias = b is not None

    in_specs = [
        pl.BlockSpec((tm, tk), lambda i, j, kk: (i, kk)),
        pl.BlockSpec((tk, tn), lambda i, j, kk: (kk, j)),
    ]
    args = [x, w]
    if has_bias:
        in_specs.append(pl.BlockSpec((1, tn), lambda i, j, kk: (0, j)))
        args.append(b.reshape(1, N))

    return pl.pallas_call(
        functools.partial(_linear_kernel, relu=relu, has_bias=has_bias),
        out_shape=jax.ShapeDtypeStruct((M, N), jnp.float32),
        grid=(M // tm, N // tn, K // tk),
        in_specs=in_specs,
        out_specs=pl.BlockSpec((tm, tn), lambda i, j, kk: (i, j)),
        scratch_shapes=[pltpu.VMEM((tm, tn), jnp.float32)],
        compiler_params=pltpu.CompilerParams(
            dimension_semantics=("parallel", "parallel", "arbitrary")),
    )(*args)


# ----------------------------------------------------------------------------
# Flash-style attention with in-kernel staggered local-causal mask
# ----------------------------------------------------------------------------

def _flash_attn_kernel(q_ref, k_ref, v_ref, pad_ref, o_ref,
                       m_ref, l_ref, acc_ref,
                       *, n_heads, d_head, scale, local_window, tq, tkv):
    kv = pl.program_id(2)
    q_start = pl.program_id(1) * tq
    kv_start = kv * tkv

    @pl.when(kv == 0)
    def _():
        m_ref[...] = jnp.full_like(m_ref, NEG_INF)
        l_ref[...] = jnp.zeros_like(l_ref)
        acc_ref[...] = jnp.zeros_like(acc_ref)

    # Skip KV tiles completely outside every head's (causal, windowed) range.
    w_max = n_heads * local_window
    needed = jnp.logical_and(kv_start <= q_start + tq - 1,
                             kv_start + tkv - 1 >= q_start - w_max)

    @pl.when(needed)
    def _():
        q = q_ref[0]           # [tq, D]
        k = k_ref[0]           # [tkv, D]
        v = v_ref[0]           # [tkv, D]
        pad_bias = pad_ref[0]  # [1, tkv], additive 0 / NEG_INF on pad keys

        row = q_start + jax.lax.broadcasted_iota(jnp.int32, (tq, tkv), 0)
        col = kv_start + jax.lax.broadcasted_iota(jnp.int32, (tq, tkv), 1)
        causal = col <= row

        for h in range(n_heads):
            lo, hi = h * d_head, (h + 1) * d_head
            qh = q[:, lo:hi]
            kh = k[:, lo:hi]
            vh = v[:, lo:hi]

            s = jax.lax.dot_general(
                qh, kh, (((1,), (1,)), ((), ())),
                preferred_element_type=jnp.float32) * scale
            s = s + pad_bias
            w_h = (h + 1) * local_window
            allowed = jnp.logical_and(causal, col >= row - w_h)
            s = jnp.where(allowed, s, NEG_INF)

            m_prev = m_ref[h]                                    # [tq, 1]
            m_new = jnp.maximum(m_prev, jnp.max(s, axis=-1, keepdims=True))
            alpha = jnp.exp(m_prev - m_new)
            p = jnp.exp(s - m_new)                               # [tq, tkv]
            l_ref[h] = alpha * l_ref[h] + jnp.sum(p, axis=-1, keepdims=True)
            acc_ref[h] = alpha * acc_ref[h] + jnp.dot(
                p, vh, preferred_element_type=jnp.float32)
            m_ref[h] = m_new

    @pl.when(kv == pl.num_programs(2) - 1)
    def _():
        outs = []
        for h in range(n_heads):
            inv_l = pl.reciprocal(l_ref[h], approx=True)
            outs.append(acc_ref[h] * inv_l)
        o_ref[0] = jnp.concatenate(outs, axis=-1).astype(o_ref.dtype)


def attention_pallas(q, k, v, pad_bias, *, n_heads, local_window_size,
                     tq=256, tkv=256):
    """Staggered local-causal multi-head attention.

    q,k,v: [B,S,D] (heads packed along D), pad_bias: [B,1,S] additive key bias.
    Returns [B,S,D].
    """
    B, S, D = q.shape
    d_head = D // n_heads
    scale = 1.0 / math.sqrt(d_head)
    tq, tkv = _tile(S, tq), _tile(S, tkv)

    q_spec = pl.BlockSpec((1, tq, D), lambda b, qi, ki: (b, qi, 0))
    kv_spec = pl.BlockSpec((1, tkv, D), lambda b, qi, ki: (b, ki, 0))
    pad_spec = pl.BlockSpec((1, 1, tkv), lambda b, qi, ki: (b, 0, ki))

    kernel = functools.partial(
        _flash_attn_kernel, n_heads=n_heads, d_head=d_head, scale=scale,
        local_window=local_window_size, tq=tq, tkv=tkv)

    return pl.pallas_call(
        kernel,
        out_shape=jax.ShapeDtypeStruct((B, S, D), jnp.float32),
        grid=(B, S // tq, S // tkv),
        in_specs=[q_spec, kv_spec, kv_spec, pad_spec],
        out_specs=pl.BlockSpec((1, tq, D), lambda b, qi, ki: (b, qi, 0)),
        scratch_shapes=[
            pltpu.VMEM((n_heads, tq, 1), jnp.float32),       # running max m
            pltpu.VMEM((n_heads, tq, 1), jnp.float32),       # running sum l
            pltpu.VMEM((n_heads, tq, d_head), jnp.float32),  # running acc
        ],
        compiler_params=pltpu.CompilerParams(
            dimension_semantics=("parallel", "parallel", "arbitrary")),
    )(q, k, v, pad_bias)


# ----------------------------------------------------------------------------
# Fused glue kernels (memory-bound paths)
# ----------------------------------------------------------------------------

def _ln(z, g, b):
    mu = jnp.mean(z, axis=-1, keepdims=True)
    var = jnp.mean((z - mu) ** 2, axis=-1, keepdims=True)
    zn = (z - mu) * jax.lax.rsqrt(var + 1e-5)
    return zn * g + b


def _proj_add_ln_kernel(a_ref, w_ref, b_ref, x_ref, g_ref, bt_ref, o_ref):
    # out = LayerNorm(x + (a @ w + b))
    y = jnp.dot(a_ref[...], w_ref[...], preferred_element_type=jnp.float32)
    y = y + b_ref[...]
    z = x_ref[...] + y
    o_ref[...] = _ln(z, g_ref[...], bt_ref[...]).astype(o_ref.dtype)


def proj_add_ln_pallas(attn, w, b, resid, gamma, beta, tm=256):
    M, D = attn.shape
    tm = _tile(M, tm)
    row_spec = pl.BlockSpec((tm, D), lambda i: (i, 0))
    w_spec = pl.BlockSpec((D, D), lambda i: (0, 0))
    vec_spec = pl.BlockSpec((1, D), lambda i: (0, 0))
    return pl.pallas_call(
        _proj_add_ln_kernel,
        out_shape=jax.ShapeDtypeStruct((M, D), jnp.float32),
        grid=(M // tm,),
        in_specs=[row_spec, w_spec, vec_spec, row_spec, vec_spec, vec_spec],
        out_specs=row_spec,
        compiler_params=pltpu.CompilerParams(dimension_semantics=("parallel",)),
    )(attn, w, b.reshape(1, D), resid, gamma.reshape(1, D), beta.reshape(1, D))


def _ffn_add_ln_kernel(x_ref, w1_ref, b1_ref, w2_ref, b2_ref, g_ref, bt_ref, o_ref):
    # out = LayerNorm(x + (relu(x @ w1 + b1) @ w2 + b2))
    x = x_ref[...]
    h = jnp.dot(x, w1_ref[...], preferred_element_type=jnp.float32) + b1_ref[...]
    h = jnp.maximum(h, 0.0)
    y = jnp.dot(h, w2_ref[...], preferred_element_type=jnp.float32) + b2_ref[...]
    z = x + y
    o_ref[...] = _ln(z, g_ref[...], bt_ref[...]).astype(o_ref.dtype)


def ffn_add_ln_pallas(x, w1, b1, w2, b2, gamma, beta, tm=256):
    M, D = x.shape
    F = w1.shape[1]
    tm = _tile(M, tm)
    row_spec = pl.BlockSpec((tm, D), lambda i: (i, 0))
    return pl.pallas_call(
        _ffn_add_ln_kernel,
        out_shape=jax.ShapeDtypeStruct((M, D), jnp.float32),
        grid=(M // tm,),
        in_specs=[
            row_spec,
            pl.BlockSpec((D, F), lambda i: (0, 0)),
            pl.BlockSpec((1, F), lambda i: (0, 0)),
            pl.BlockSpec((F, D), lambda i: (0, 0)),
            pl.BlockSpec((1, D), lambda i: (0, 0)),
            pl.BlockSpec((1, D), lambda i: (0, 0)),
            pl.BlockSpec((1, D), lambda i: (0, 0)),
        ],
        out_specs=row_spec,
        compiler_params=pltpu.CompilerParams(dimension_semantics=("parallel",)),
    )(x, w1, b1.reshape(1, F), w2, b2.reshape(1, D),
      gamma.reshape(1, D), beta.reshape(1, D))


def _ln_kernel(x_ref, g_ref, b_ref, o_ref):
    o_ref[...] = _ln(x_ref[...], g_ref[...], b_ref[...]).astype(o_ref.dtype)


def layernorm_pallas(x, gamma, beta, tm=512):
    M, D = x.shape
    tm = _tile(M, tm)
    row_spec = pl.BlockSpec((tm, D), lambda i: (i, 0))
    vec_spec = pl.BlockSpec((1, D), lambda i: (0, 0))
    return pl.pallas_call(
        _ln_kernel,
        out_shape=jax.ShapeDtypeStruct((M, D), jnp.float32),
        grid=(M // tm,),
        in_specs=[row_spec, vec_spec, vec_spec],
        out_specs=row_spec,
        compiler_params=pltpu.CompilerParams(dimension_semantics=("parallel",)),
    )(x, gamma.reshape(1, D), beta.reshape(1, D))


# ----------------------------------------------------------------------------
# Model glue (plain JAX)
# ----------------------------------------------------------------------------

def sinusoidal_positional_encoding(max_seq_len, d_model):
    position = jnp.arange(max_seq_len, dtype=jnp.float32)[:, None]
    div_term = jnp.exp(
        jnp.arange(0, d_model, 2, dtype=jnp.float32)
        * (-math.log(10000.0) / d_model))
    pe = jnp.zeros((max_seq_len, d_model), dtype=jnp.float32)
    pe = pe.at[:, 0::2].set(jnp.sin(position * div_term))
    pe = pe.at[:, 1::2].set(jnp.cos(position * div_term))
    return pe


def init_params(key, vocab_size, d_model, n_heads, dim_feedforward, num_layers,
                max_seq_len):
    params = {}
    k = key
    k, sub = jax.random.split(k)
    emb = 0.02 * jax.random.normal(sub, (vocab_size, d_model), jnp.float32)
    params["embedding"] = emb
    params["lm_head_w"] = emb.T  # tied lm_head, transposed ONCE at init
    params["layers"] = []
    for _ in range(num_layers):
        lp = {}
        k, k1, k2, k3, k4 = jax.random.split(k, 5)
        lp["w_in"] = 0.02 * jax.random.normal(k1, (d_model, 3 * d_model))
        lp["b_in"] = jnp.zeros((3 * d_model,), jnp.float32)
        lp["w_out"] = 0.02 * jax.random.normal(k2, (d_model, d_model))
        lp["b_out"] = jnp.zeros((d_model,), jnp.float32)
        lp["w1"] = 0.02 * jax.random.normal(k3, (d_model, dim_feedforward))
        lp["b1"] = jnp.zeros((dim_feedforward,), jnp.float32)
        lp["w2"] = 0.02 * jax.random.normal(k4, (dim_feedforward, d_model))
        lp["b2"] = jnp.zeros((d_model,), jnp.float32)
        lp["g1"] = jnp.ones((d_model,), jnp.float32)
        lp["bn1"] = jnp.zeros((d_model,), jnp.float32)
        lp["g2"] = jnp.ones((d_model,), jnp.float32)
        lp["bn2"] = jnp.zeros((d_model,), jnp.float32)
        params["layers"].append(lp)
    params["lnf_g"] = jnp.ones((d_model,), jnp.float32)
    params["lnf_b"] = jnp.zeros((d_model,), jnp.float32)
    params["pos_enc"] = sinusoidal_positional_encoding(max_seq_len, d_model)
    return params


def decoder_layer(x, pad_bias, lp, n_heads, local_window_size):
    B, S, D = x.shape
    x2 = x.reshape(B * S, D)

    qkv = linear_pallas(x2, lp["w_in"], lp["b_in"])                 # [B*S, 3D]
    q = qkv[:, :D].reshape(B, S, D)
    k = qkv[:, D:2 * D].reshape(B, S, D)
    v = qkv[:, 2 * D:].reshape(B, S, D)

    attn = attention_pallas(q, k, v, pad_bias, n_heads=n_heads,
                            local_window_size=local_window_size)    # [B,S,D]

    # fused: out-projection + residual + LayerNorm1
    x2 = proj_add_ln_pallas(attn.reshape(B * S, D), lp["w_out"], lp["b_out"],
                            x2, lp["g1"], lp["bn1"])
    # fused: FFN (w1 + ReLU + w2) + residual + LayerNorm2
    x2 = ffn_add_ln_pallas(x2, lp["w1"], lp["b1"], lp["w2"], lp["b2"],
                           lp["g2"], lp["bn2"])
    return x2.reshape(B, S, D)


def decoder_model_forward(params, input_ids, *, n_heads, local_window_size,
                          pad_token_id=0):
    B, S = input_ids.shape
    D = params["embedding"].shape[1]
    V = params["lm_head_w"].shape[1]

    # Additive pad-key bias [B,1,S] (replaces the O(B*H*S^2) HBM mask; the
    # staggered causal window is generated inside the attention kernel).
    pad_bias = jnp.where(input_ids == pad_token_id, NEG_INF, 0.0
                         ).astype(jnp.float32)[:, None, :]

    tok = jnp.take(params["embedding"], input_ids, axis=0)          # [B,S,D]
    x = tok + params["pos_enc"][:S][None]

    for lp in params["layers"]:
        x = decoder_layer(x, pad_bias, lp, n_heads, local_window_size)

    x2 = layernorm_pallas(x.reshape(B * S, D), params["lnf_g"], params["lnf_b"])

    # tied lm_head: logits = x @ embedding^T, no bias
    logits = linear_pallas(x2, params["lm_head_w"], None)
    return logits.reshape(B, S, V)


# ----------------------------------------------------------------------------
# Main
# ----------------------------------------------------------------------------

VOCAB_SIZE = 64
D_MODEL = 32
N_HEADS = 4
LOCAL_WINDOW = 2
MAX_SEQ_LEN = 16
DIM_FF = 64
NUM_LAYERS = 2

if __name__ == "__main__":
    key = jax.random.PRNGKey(0)
    params = init_params(key, VOCAB_SIZE, D_MODEL, N_HEADS, DIM_FF, NUM_LAYERS,
                         MAX_SEQ_LEN)

    B, S = 2, 8
    # avoid pad_token_id=0 so semantics match PyTorch (a fully-masked pad query
    # row is NaN there); our kernel stays finite either way.
    ids_key = jax.random.fold_in(key, 123)
    input_ids = jax.random.randint(ids_key, (B, S), 1, VOCAB_SIZE, jnp.int32)

    fwd = jax.jit(functools.partial(decoder_model_forward,
                                    n_heads=N_HEADS,
                                    local_window_size=LOCAL_WINDOW))
    logits = fwd(params, input_ids)
    logits = jax.block_until_ready(logits)

    assert logits.shape == (B, S, VOCAB_SIZE)
    assert bool(jnp.all(jnp.isfinite(logits)))
    print("KERNEL_OK")
</pallas_src>

<mosaic_0001>
module attributes {stable_mosaic.version = 11 : i64} {
  func.func @_proj_add_ln_kernel(%arg0: i32, %arg1: memref<16x32xf32, #tpu.memory_space<vmem>>, %arg2: memref<32x32xf32, #tpu.memory_space<vmem>>, %arg3: memref<1x32xf32, #tpu.memory_space<vmem>>, %arg4: memref<16x32xf32, #tpu.memory_space<vmem>>, %arg5: memref<1x32xf32, #tpu.memory_space<vmem>>, %arg6: memref<1x32xf32, #tpu.memory_space<vmem>>, %arg7: memref<16x32xf32, #tpu.memory_space<vmem>>) attributes {dimension_semantics = [#tpu.dimension_semantics<parallel>], iteration_bounds = array<i64: 1>, scalar_prefetch = 0 : i64, scratch_operands = 0 : i64, tpu.core_type = #tpu.core_type<tc>, window_params = [{transform_indices = @transform_0, window_bounds = array<i64: 16, 32>}, {pipeline_mode = #tpu.pipeline_mode<synchronous>, transform_indices = @transform_1, window_bounds = array<i64: 32, 32>}, {pipeline_mode = #tpu.pipeline_mode<synchronous>, transform_indices = @transform_2, window_bounds = array<i64: 1, 32>}, {transform_indices = @transform_3, window_bounds = array<i64: 16, 32>}, {pipeline_mode = #tpu.pipeline_mode<synchronous>, transform_indices = @transform_4, window_bounds = array<i64: 1, 32>}, {pipeline_mode = #tpu.pipeline_mode<synchronous>, transform_indices = @transform_5, window_bounds = array<i64: 1, 32>}, {transform_indices = @transform_6, window_bounds = array<i64: 16, 32>}]} {
    %c0 = arith.constant 0 : index
    %c0_0 = arith.constant 0 : index
    %0 = vector.load %arg1[%c0, %c0_0] : memref<16x32xf32, #tpu.memory_space<vmem>>, vector<16x32xf32>
    %c0_1 = arith.constant 0 : index
    %c0_2 = arith.constant 0 : index
    %1 = vector.load %arg2[%c0_1, %c0_2] : memref<32x32xf32, #tpu.memory_space<vmem>>, vector<32x32xf32>
    %cst = arith.constant dense<0.000000e+00> : vector<16x32xf32>
    %2 = tpu.matmul %0, %1, %cst {dimension_numbers = #tpu.dot_dimension_numbers<[1], [0], [0], [1], [0, 0, 1, 1], [], []>} : vector<16x32xf32>, vector<32x32xf32>, vector<16x32xf32> -> vector<16x32xf32>
    %c0_3 = arith.constant 0 : index
    %c0_4 = arith.constant 0 : index
    %3 = vector.load %arg3[%c0_3, %c0_4] : memref<1x32xf32, #tpu.memory_space<vmem>>, vector<1x32xf32>
    %4 = vector.broadcast %3 : vector<1x32xf32> to vector<16x32xf32>
    %5 = arith.addf %2, %4 : vector<16x32xf32>
    %c0_5 = arith.constant 0 : index
    %c0_6 = arith.constant 0 : index
    %6 = vector.load %arg4[%c0_5, %c0_6] : memref<16x32xf32, #tpu.memory_space<vmem>>, vector<16x32xf32>
    %7 = arith.addf %6, %5 : vector<16x32xf32>
    %c0_7 = arith.constant 0 : index
    %c0_8 = arith.constant 0 : index
    %8 = vector.load %arg5[%c0_7, %c0_8] : memref<1x32xf32, #tpu.memory_space<vmem>>, vector<1x32xf32>
    %c0_9 = arith.constant 0 : index
    %c0_10 = arith.constant 0 : index
    %9 = vector.load %arg6[%c0_9, %c0_10] : memref<1x32xf32, #tpu.memory_space<vmem>>, vector<1x32xf32>
    %cst_11 = arith.constant dense<0.000000e+00> : vector<16xf32>
    %10 = vector.multi_reduction <add>, %7, %cst_11 [1] : vector<16x32xf32> to vector<16xf32>
    %11 = vector.shape_cast %10 : vector<16xf32> to vector<16x1xf32>
    %cst_12 = arith.constant 3.200000e+01 : f32
    %12 = vector.broadcast %cst_12 : f32 to vector<16x1xf32>
    %13 = arith.divf %11, %12 : vector<16x1xf32>
    %14 = vector.broadcast %13 : vector<16x1xf32> to vector<16x32xf32>
    %15 = arith.subf %7, %14 : vector<16x32xf32>
    %16 = arith.mulf %15, %15 : vector<16x32xf32>
    %cst_13 = arith.constant dense<0.000000e+00> : vector<16xf32>
    %17 = vector.multi_reduction <add>, %16, %cst_13 [1] : vector<16x32xf32> to vector<16xf32>
    %18 = vector.shape_cast %17 : vector<16xf32> to vector<16x1xf32>
    %cst_14 = arith.constant 3.200000e+01 : f32
    %19 = vector.broadcast %cst_14 : f32 to vector<16x1xf32>
    %20 = arith.divf %18, %19 : vector<16x1xf32>
    %21 = vector.broadcast %13 : vector<16x1xf32> to vector<16x32xf32>
    %22 = arith.subf %7, %21 : vector<16x32xf32>
    %cst_15 = arith.constant 9.99999974E-6 : f32
    %23 = vector.broadcast %cst_15 : f32 to vector<16x1xf32>
    %24 = arith.addf %20, %23 : vector<16x1xf32>
    %25 = math.rsqrt %24 : vector<16x1xf32>
    %26 = vector.broadcast %25 : vector<16x1xf32> to vector<16x32xf32>
    %27 = arith.mulf %22, %26 : vector<16x32xf32>
    %28 = vector.broadcast %8 : vector<1x32xf32> to vector<16x32xf32>
    %29 = arith.mulf %27, %28 : vector<16x32xf32>
    %30 = vector.broadcast %9 : vector<1x32xf32> to vector<16x32xf32>
    %31 = arith.addf %29, %30 : vector<16x32xf32>
    %c0_16 = arith.constant 0 : index
    %c0_17 = arith.constant 0 : index
    %32 = vector.load %arg7[%c0_16, %c0_17] : memref<16x32xf32, #tpu.memory_space<vmem>>, vector<16x32xf32>
    tpu.vector_store %arg7[%c0_16, %c0_17], %31 {strides = array<i32>} : memref<16x32xf32, #tpu.memory_space<vmem>>, vector<16x32xf32>,
    return
  }
  func.func @transform_0(%arg0: i32) -> (i32, i32) {
    %c0_i32 = arith.constant 0 : i32
    %c0_i32_0 = arith.constant 0 : i32
    return %arg0, %c0_i32 : i32, i32
  }
  func.func @transform_1(%arg0: i32) -> (i32, i32) {
    %c0_i32 = arith.constant 0 : i32
    %c0_i32_0 = arith.constant 0 : i32
    %c0_i32_1 = arith.constant 0 : i32
    return %c0_i32, %c0_i32_0 : i32, i32
  }
  func.func @transform_2(%arg0: i32) -> (i32, i32) {
    %c0_i32 = arith.constant 0 : i32
    %c0_i32_0 = arith.constant 0 : i32
    %c0_i32_1 = arith.constant 0 : i32
    return %c0_i32, %c0_i32_0 : i32, i32
  }
  func.func @transform_3(%arg0: i32) -> (i32, i32) {
    %c0_i32 = arith.constant 0 : i32
    %c0_i32_0 = arith.constant 0 : i32
    return %arg0, %c0_i32 : i32, i32
  }
  func.func @transform_4(%arg0: i32) -> (i32, i32) {
    %c0_i32 = arith.constant 0 : i32
    %c0_i32_0 = arith.constant 0 : i32
    %c0_i32_1 = arith.constant 0 : i32
    return %c0_i32, %c0_i32_0 : i32, i32
  }
  func.func @transform_5(%arg0: i32) -> (i32, i32) {
    %c0_i32 = arith.constant 0 : i32
    %c0_i32_0 = arith.constant 0 : i32
    %c0_i32_1 = arith.constant 0 : i32
    return %c0_i32, %c0_i32_0 : i32, i32
  }
  func.func @transform_6(%arg0: i32) -> (i32, i32) {
    %c0_i32 = arith.constant 0 : i32
    %c0_i32_0 = arith.constant 0 : i32
    return %arg0, %c0_i32 : i32, i32
  }
}

module attributes {stable_mosaic.version = 11 : i64} {
  func.func @_linear_kernel(%arg0: i32, %arg1: i32, %arg2: i32, %arg3: memref<16x32xf32, #tpu.memory_space<vmem>>, %arg4: memref<32x96xf32, #tpu.memory_space<vmem>>, %arg5: memref<1x96xf32, #tpu.memory_space<vmem>>, %arg6: memref<16x96xf32, #tpu.memory_space<vmem>>, %arg7: memref<16x96xf32, #tpu.memory_space<vmem>>) attributes {dimension_semantics = [#tpu.dimension_semantics<parallel>, #tpu.dimension_semantics<parallel>, #tpu.dimension_semantics<arbitrary>], iteration_bounds = array<i64: 1, 1, 1>, scalar_prefetch = 0 : i64, scratch_operands = 1 : i64, tpu.core_type = #tpu.core_type<tc>, window_params = [{transform_indices = @transform_0, window_bounds = array<i64: 16, 32>}, {transform_indices = @transform_1, window_bounds = array<i64: 32, 96>}, {transform_indices = @transform_2, window_bounds = array<i64: 1, 96>}, {transform_indices = @transform_3, window_bounds = array<i64: 16, 96>}]} {
    %c0_i32 = arith.constant 0 : i32
    %0 = arith.cmpi eq, %arg2, %c0_i32 : i32
    %1 = arith.extui %0 : i1 to i32
    %c0_i32_0 = arith.constant 0 : i32
    %2 = arith.cmpi ne, %1, %c0_i32_0 : i32
    scf.if %2 {
      %cst_10 = arith.constant 0.000000e+00 : f32
      %12 = vector.broadcast %cst_10 : f32 to vector<16x96xf32>
      %c0_11 = arith.constant 0 : index
      %c0_12 = arith.constant 0 : index
      %13 = vector.load %arg7[%c0_11, %c0_12] : memref<16x96xf32, #tpu.memory_space<vmem>>, vector<16x96xf32>
      tpu.vector_store %arg7[%c0_11, %c0_12], %12 {strides = array<i32>} : memref<16x96xf32, #tpu.memory_space<vmem>>, vector<16x96xf32>,
    } else {
    }
    %c0 = arith.constant 0 : index
    %c0_1 = arith.constant 0 : index
    %3 = vector.load %arg7[%c0, %c0_1] : memref<16x96xf32, #tpu.memory_space<vmem>>, vector<16x96xf32>
    %c0_2 = arith.constant 0 : index
    %c0_3 = arith.constant 0 : index
    %4 = vector.load %arg3[%c0_2, %c0_3] : memref<16x32xf32, #tpu.memory_space<vmem>>, vector<16x32xf32>
    %c0_4 = arith.constant 0 : index
    %c0_5 = arith.constant 0 : index
    %5 = vector.load %arg4[%c0_4, %c0_5] : memref<32x96xf32, #tpu.memory_space<vmem>>, vector<32x96xf32>
    %cst = arith.constant dense<0.000000e+00> : vector<16x96xf32>
    %6 = tpu.matmul %4, %5, %cst {dimension_numbers = #tpu.dot_dimension_numbers<[1], [0], [0], [1], [0, 0, 1, 1], [], []>} : vector<16x32xf32>, vector<32x96xf32>, vector<16x96xf32> -> vector<16x96xf32>
    %7 = arith.addf %3, %6 : vector<16x96xf32>
    %c0_6 = arith.constant 0 : index
    %c0_7 = arith.constant 0 : index
    %8 = vector.load %arg7[%c0_6, %c0_7] : memref<16x96xf32, #tpu.memory_space<vmem>>, vector<16x96xf32>
    tpu.vector_store %arg7[%c0_6, %c0_7], %7 {strides = array<i32>} : memref<16x96xf32, #tpu.memory_space<vmem>>, vector<16x96xf32>,
    %c0_i32_8 = arith.constant 0 : i32
    %9 = arith.cmpi eq, %arg2, %c0_i32_8 : i32
    %10 = arith.extui %9 : i1 to i32
    %c0_i32_9 = arith.constant 0 : i32
    %11 = arith.cmpi ne, %10, %c0_i32_9 : i32
    scf.if %11 {
      %c0_10 = arith.constant 0 : index
      %c0_11 = arith.constant 0 : index
      %12 = vector.load %arg7[%c0_10, %c0_11] : memref<16x96xf32, #tpu.memory_space<vmem>>, vector<16x96xf32>
      %c0_12 = arith.constant 0 : index
      %c0_13 = arith.constant 0 : index
      %13 = vector.load %arg5[%c0_12, %c0_13] : memref<1x96xf32, #tpu.memory_space<vmem>>, vector<1x96xf32>
      %14 = vector.broadcast %13 : vector<1x96xf32> to vector<16x96xf32>
      %15 = arith.addf %12, %14 : vector<16x96xf32>
      %c0_14 = arith.constant 0 : index
      %c0_15 = arith.constant 0 : index
      %16 = vector.load %arg6[%c0_14, %c0_15] : memref<16x96xf32, #tpu.memory_space<vmem>>, vector<16x96xf32>
      tpu.vector_store %arg6[%c0_14, %c0_15], %15 {strides = array<i32>} : memref<16x96xf32, #tpu.memory_space<vmem>>, vector<16x96xf32>,
    } else {
    }
    return
  }
  func.func @transform_0(%arg0: i32, %arg1: i32, %arg2: i32) -> (i32, i32) {
    %c0_i32 = arith.constant 0 : i32
    return %arg0, %arg2 : i32, i32
  }
  func.func @transform_1(%arg0: i32, %arg1: i32, %arg2: i32) -> (i32, i32) {
    %c0_i32 = arith.constant 0 : i32
    return %arg2, %arg1 : i32, i32
  }
  func.func @transform_2(%arg0: i32, %arg1: i32, %arg2: i32) -> (i32, i32) {
    %c0_i32 = arith.constant 0 : i32
    %c0_i32_0 = arith.constant 0 : i32
    return %c0_i32, %arg1 : i32, i32
  }
  func.func @transform_3(%arg0: i32, %arg1: i32, %arg2: i32) -> (i32, i32) {
    %c0_i32 = arith.constant 0 : i32
    return %arg0, %arg1 : i32, i32
  }
}

module attributes {stable_mosaic.version = 11 : i64} {
  func.func @_ffn_add_ln_kernel(%arg0: i32, %arg1: memref<16x32xf32, #tpu.memory_space<vmem>>, %arg2: memref<32x64xf32, #tpu.memory_space<vmem>>, %arg3: memref<1x64xf32, #tpu.memory_space<vmem>>, %arg4: memref<64x32xf32, #tpu.memory_space<vmem>>, %arg5: memref<1x32xf32, #tpu.memory_space<vmem>>, %arg6: memref<1x32xf32, #tpu.memory_space<vmem>>, %arg7: memref<1x32xf32, #tpu.memory_space<vmem>>, %arg8: memref<16x32xf32, #tpu.memory_space<vmem>>) attributes {dimension_semantics = [#tpu.dimension_semantics<parallel>], iteration_bounds = array<i64: 1>, scalar_prefetch = 0 : i64, scratch_operands = 0 : i64, tpu.core_type = #tpu.core_type<tc>, window_params = [{transform_indices = @transform_0, window_bounds = array<i64: 16, 32>}, {pipeline_mode = #tpu.pipeline_mode<synchronous>, transform_indices = @transform_1, window_bounds = array<i64: 32, 64>}, {pipeline_mode = #tpu.pipeline_mode<synchronous>, transform_indices = @transform_2, window_bounds = array<i64: 1, 64>}, {pipeline_mode = #tpu.pipeline_mode<synchronous>, transform_indices = @transform_3, window_bounds = array<i64: 64, 32>}, {pipeline_mode = #tpu.pipeline_mode<synchronous>, transform_indices = @transform_4, window_bounds = array<i64: 1, 32>}, {pipeline_mode = #tpu.pipeline_mode<synchronous>, transform_indices = @transform_5, window_bounds = array<i64: 1, 32>}, {pipeline_mode = #tpu.pipeline_mode<synchronous>, transform_indices = @transform_6, window_bounds = array<i64: 1, 32>}, {transform_indices = @transform_7, window_bounds = array<i64: 16, 32>}]} {
    %c0 = arith.constant 0 : index
    %c0_0 = arith.constant 0 : index
    %0 = vector.load %arg1[%c0, %c0_0] : memref<16x32xf32, #tpu.memory_space<vmem>>, vector<16x32xf32>
    %c0_1 = arith.constant 0 : index
    %c0_2 = arith.constant 0 : index
    %1 = vector.load %arg2[%c0_1, %c0_2] : memref<32x64xf32, #tpu.memory_space<vmem>>, vector<32x64xf32>
    %cst = arith.constant dense<0.000000e+00> : vector<16x64xf32>
    %2 = tpu.matmul %0, %1, %cst {dimension_numbers = #tpu.dot_dimension_numbers<[1], [0], [0], [1], [0, 0, 1, 1], [], []>} : vector<16x32xf32>, vector<32x64xf32>, vector<16x64xf32> -> vector<16x64xf32>
    %c0_3 = arith.constant 0 : index
    %c0_4 = arith.constant 0 : index
    %3 = vector.load %arg3[%c0_3, %c0_4] : memref<1x64xf32, #tpu.memory_space<vmem>>, vector<1x64xf32>
    %4 = vector.broadcast %3 : vector<1x64xf32> to vector<16x64xf32>
    %5 = arith.addf %2, %4 : vector<16x64xf32>
    %cst_5 = arith.constant 0.000000e+00 : f32
    %6 = vector.broadcast %cst_5 : f32 to vector<16x64xf32>
    %7 = arith.maximumf %5, %6 : vector<16x64xf32>
    %c0_6 = arith.constant 0 : index
    %c0_7 = arith.constant 0 : index
    %8 = vector.load %arg4[%c0_6, %c0_7] : memref<64x32xf32, #tpu.memory_space<vmem>>, vector<64x32xf32>
    %cst_8 = arith.constant dense<0.000000e+00> : vector<16x32xf32>
    %9 = tpu.matmul %7, %8, %cst_8 {dimension_numbers = #tpu.dot_dimension_numbers<[1], [0], [0], [1], [0, 0, 1, 1], [], []>} : vector<16x64xf32>, vector<64x32xf32>, vector<16x32xf32> -> vector<16x32xf32>
    %c0_9 = arith.constant 0 : index
    %c0_10 = arith.constant 0 : index
    %10 = vector.load %arg5[%c0_9, %c0_10] : memref<1x32xf32, #tpu.memory_space<vmem>>, vector<1x32xf32>
    %11 = vector.broadcast %10 : vector<1x32xf32> to vector<16x32xf32>
    %12 = arith.addf %9, %11 : vector<16x32xf32>
    %13 = arith.addf %0, %12 : vector<16x32xf32>
    %c0_11 = arith.constant 0 : index
    %c0_12 = arith.constant 0 : index
    %14 = vector.load %arg6[%c0_11, %c0_12] : memref<1x32xf32, #tpu.memory_space<vmem>>, vector<1x32xf32>
    %c0_13 = arith.constant 0 : index
    %c0_14 = arith.constant 0 : index
    %15 = vector.load %arg7[%c0_13, %c0_14] : memref<1x32xf32, #tpu.memory_space<vmem>>, vector<1x32xf32>
    %cst_15 = arith.constant dense<0.000000e+00> : vector<16xf32>
    %16 = vector.multi_reduction <add>, %13, %cst_15 [1] : vector<16x32xf32> to vector<16xf32>
    %17 = vector.shape_cast %16 : vector<16xf32> to vector<16x1xf32>
    %cst_16 = arith.constant 3.200000e+01 : f32
    %18 = vector.broadcast %cst_16 : f32 to vector<16x1xf32>
    %19 = arith.divf %17, %18 : vector<16x1xf32>
    %20 = vector.broadcast %19 : vector<16x1xf32> to vector<16x32xf32>
    %21 = arith.subf %13, %20 : vector<16x32xf32>
    %22 = arith.mulf %21, %21 : vector<16x32xf32>
    %cst_17 = arith.constant dense<0.000000e+00> : vector<16xf32>
    %23 = vector.multi_reduction <add>, %22, %cst_17 [1] : vector<16x32xf32> to vector<16xf32>
    %24 = vector.shape_cast %23 : vector<16xf32> to vector<16x1xf32>
    %cst_18 = arith.constant 3.200000e+01 : f32
    %25 = vector.broadcast %cst_18 : f32 to vector<16x1xf32>
    %26 = arith.divf %24, %25 : vector<16x1xf32>
    %27 = vector.broadcast %19 : vector<16x1xf32> to vector<16x32xf32>
    %28 = arith.subf %13, %27 : vector<16x32xf32>
    %cst_19 = arith.constant 9.99999974E-6 : f32
    %29 = vector.broadcast %cst_19 : f32 to vector<16x1xf32>
    %30 = arith.addf %26, %29 : vector<16x1xf32>
    %31 = math.rsqrt %30 : vector<16x1xf32>
    %32 = vector.broadcast %31 : vector<16x1xf32> to vector<16x32xf32>
    %33 = arith.mulf %28, %32 : vector<16x32xf32>
    %34 = vector.broadcast %14 : vector<1x32xf32> to vector<16x32xf32>
    %35 = arith.mulf %33, %34 : vector<16x32xf32>
    %36 = vector.broadcast %15 : vector<1x32xf32> to vector<16x32xf32>
    %37 = arith.addf %35, %36 : vector<16x32xf32>
    %c0_20 = arith.constant 0 : index
    %c0_21 = arith.constant 0 : index
    %38 = vector.load %arg8[%c0_20, %c0_21] : memref<16x32xf32, #tpu.memory_space<vmem>>, vector<16x32xf32>
    tpu.vector_store %arg8[%c0_20, %c0_21], %37 {strides = array<i32>} : memref<16x32xf32, #tpu.memory_space<vmem>>, vector<16x32xf32>,
    return
  }
  func.func @transform_0(%arg0: i32) -> (i32, i32) {
    %c0_i32 = arith.constant 0 : i32
    %c0_i32_0 = arith.constant 0 : i32
    return %arg0, %c0_i32 : i32, i32
  }
  func.func @transform_1(%arg0: i32) -> (i32, i32) {
    %c0_i32 = arith.constant 0 : i32
    %c0_i32_0 = arith.constant 0 : i32
    %c0_i32_1 = arith.constant 0 : i32
    return %c0_i32, %c0_i32_0 : i32, i32
  }
  func.func @transform_2(%arg0: i32) -> (i32, i32) {
    %c0_i32 = arith.constant 0 : i32
    %c0_i32_0 = arith.constant 0 : i32
    %c0_i32_1 = arith.constant 0 : i32
    return %c0_i32, %c0_i32_0 : i32, i32
  }
  func.func @transform_3(%arg0: i32) -> (i32, i32) {
    %c0_i32 = arith.constant 0 : i32
    %c0_i32_0 = arith.constant 0 : i32
    %c0_i32_1 = arith.constant 0 : i32
    return %c0_i32, %c0_i32_0 : i32, i32
  }
  func.func @transform_4(%arg0: i32) -> (i32, i32) {
    %c0_i32 = arith.constant 0 : i32
    %c0_i32_0 = arith.constant 0 : i32
    %c0_i32_1 = arith.constant 0 : i32
    return %c0_i32, %c0_i32_0 : i32, i32
  }
  func.func @transform_5(%arg0: i32) -> (i32, i32) {
    %c0_i32 = arith.constant 0 : i32
    %c0_i32_0 = arith.constant 0 : i32
    %c0_i32_1 = arith.constant 0 : i32
    return %c0_i32, %c0_i32_0 : i32, i32
  }
  func.func @transform_6(%arg0: i32) -> (i32, i32) {
    %c0_i32 = arith.constant 0 : i32
    %c0_i32_0 = arith.constant 0 : i32
    %c0_i32_1 = arith.constant 0 : i32
    return %c0_i32, %c0_i32_0 : i32, i32
  }
  func.func @transform_7(%arg0: i32) -> (i32, i32) {
    %c0_i32 = arith.constant 0 : i32
    %c0_i32_0 = arith.constant 0 : i32
    return %arg0, %c0_i32 : i32, i32
  }
}

module attributes {stable_mosaic.version = 11 : i64} {
  func.func @_flash_attn_kernel(%arg0: i32, %arg1: i32, %arg2: i32, %arg3: memref<1x8x32xf32, #tpu.memory_space<vmem>>, %arg4: memref<1x8x32xf32, #tpu.memory_space<vmem>>, %arg5: memref<1x8x32xf32, #tpu.memory_space<vmem>>, %arg6: memref<1x1x8xf32, #tpu.memory_space<vmem>>, %arg7: memref<1x8x32xf32, #tpu.memory_space<vmem>>, %arg8: memref<4x8x1xf32, #tpu.memory_space<vmem>>, %arg9: memref<4x8x1xf32, #tpu.memory_space<vmem>>, %arg10: memref<4x8x8xf32, #tpu.memory_space<vmem>>) attributes {dimension_semantics = [#tpu.dimension_semantics<parallel>, #tpu.dimension_semantics<parallel>, #tpu.dimension_semantics<arbitrary>], iteration_bounds = array<i64: 2, 1, 1>, scalar_prefetch = 0 : i64, scratch_operands = 3 : i64, tpu.core_type = #tpu.core_type<tc>, window_params = [{transform_indices = @transform_0, window_bounds = array<i64: 1, 8, 32>}, {transform_indices = @transform_1, window_bounds = array<i64: 1, 8, 32>}, {transform_indices = @transform_2, window_bounds = array<i64: 1, 8, 32>}, {transform_indices = @transform_3, window_bounds = array<i64: 1, 1, 8>}, {transform_indices = @transform_4, window_bounds = array<i64: 1, 8, 32>}]} {
    %c8_i32 = arith.constant 8 : i32
    %0 = arith.muli %arg1, %c8_i32 : i32
    %c8_i32_0 = arith.constant 8 : i32
    %1 = arith.muli %arg2, %c8_i32_0 : i32
    %c0_i32 = arith.constant 0 : i32
    %2 = arith.cmpi eq, %arg2, %c0_i32 : i32
    %3 = arith.extui %2 : i1 to i32
    %c0_i32_1 = arith.constant 0 : i32
    %4 = arith.cmpi ne, %3, %c0_i32_1 : i32
    scf.if %4 {
      %cst = arith.constant -1.000000e+30 : f32
      %18 = vector.broadcast %cst : f32 to vector<4x8x1xf32>
      %c0 = arith.constant 0 : index
      %c0_9 = arith.constant 0 : index
      %c0_10 = arith.constant 0 : index
      %19 = vector.load %arg8[%c0, %c0_9, %c0_10] : memref<4x8x1xf32, #tpu.memory_space<vmem>>, vector<4x8x1xf32>
      tpu.vector_store %arg8[%c0, %c0_9, %c0_10], %18 {strides = array<i32>} : memref<4x8x1xf32, #tpu.memory_space<vmem>>, vector<4x8x1xf32>,
      %cst_11 = arith.constant 0.000000e+00 : f32
      %20 = vector.broadcast %cst_11 : f32 to vector<4x8x1xf32>
      %c0_12 = arith.constant 0 : index
      %c0_13 = arith.constant 0 : index
      %c0_14 = arith.constant 0 : index
      %21 = vector.load %arg9[%c0_12, %c0_13, %c0_14] : memref<4x8x1xf32, #tpu.memory_space<vmem>>, vector<4x8x1xf32>
      tpu.vector_store %arg9[%c0_12, %c0_13, %c0_14], %20 {strides = array<i32>} : memref<4x8x1xf32, #tpu.memory_space<vmem>>, vector<4x8x1xf32>,
      %cst_15 = arith.constant 0.000000e+00 : f32
      %22 = vector.broadcast %cst_15 : f32 to vector<4x8x8xf32>
      %c0_16 = arith.constant 0 : index
      %c0_17 = arith.constant 0 : index
      %c0_18 = arith.constant 0 : index
      %23 = vector.load %arg10[%c0_16, %c0_17, %c0_18] : memref<4x8x8xf32, #tpu.memory_space<vmem>>, vector<4x8x8xf32>
      tpu.vector_store %arg10[%c0_16, %c0_17, %c0_18], %22 {strides = array<i32>} : memref<4x8x8xf32, #tpu.memory_space<vmem>>, vector<4x8x8xf32>,
    } else {
    }
    %c8_i32_2 = arith.constant 8 : i32
    %5 = arith.addi %0, %c8_i32_2 : i32
    %c1_i32 = arith.constant 1 : i32
    %6 = arith.subi %5, %c1_i32 : i32
    %7 = arith.cmpi sle, %1, %6 : i32
    %c8_i32_3 = arith.constant 8 : i32
    %8 = arith.addi %1, %c8_i32_3 : i32
    %c1_i32_4 = arith.constant 1 : i32
    %9 = arith.subi %8, %c1_i32_4 : i32
    %c8_i32_5 = arith.constant 8 : i32
    %10 = arith.subi %0, %c8_i32_5 : i32
    %11 = arith.cmpi sge, %9, %10 : i32
    %12 = arith.andi %7, %11 : i1
    %13 = arith.extui %12 : i1 to i32
    %c0_i32_6 = arith.constant 0 : i32
    %14 = arith.cmpi ne, %13, %c0_i32_6 : i32
    scf.if %14 {
      %c0 = arith.constant 0 : index
      %c0_9 = arith.constant 0 : index
      %c0_10 = arith.constant 0 : index
      %18 = vector.load %arg3[%c0, %c0_9, %c0_10] : memref<1x8x32xf32, #tpu.memory_space<vmem>>, vector<1x8x32xf32>
      %19 = vector.shape_cast %18 : vector<1x8x32xf32> to vector<8x32xf32>
      %c0_11 = arith.constant 0 : index
      %c0_12 = arith.constant 0 : index
      %c0_13 = arith.constant 0 : index
      %20 = vector.load %arg4[%c0_11, %c0_12, %c0_13] : memref<1x8x32xf32, #tpu.memory_space<vmem>>, vector<1x8x32xf32>
      %21 = vector.shape_cast %20 : vector<1x8x32xf32> to vector<8x32xf32>
      %c0_14 = arith.constant 0 : index
      %c0_15 = arith.constant 0 : index
      %c0_16 = arith.constant 0 : index
      %22 = vector.load %arg5[%c0_14, %c0_15, %c0_16] : memref<1x8x32xf32, #tpu.memory_space<vmem>>, vector<1x8x32xf32>
      %23 = vector.shape_cast %22 : vector<1x8x32xf32> to vector<8x32xf32>
      %c0_17 = arith.constant 0 : index
      %c0_18 = arith.constant 0 : index
      %c0_19 = arith.constant 0 : index
      %24 = vector.load %arg6[%c0_17, %c0_18, %c0_19] : memref<1x1x8xf32, #tpu.memory_space<vmem>>, vector<1x1x8xf32>
      %25 = vector.shape_cast %24 : vector<1x1x8xf32> to vector<1x8xf32>
      %26 = tpu.iota {dimensions = array<i32: 0>} : vector<8x8xi32>
      %27 = vector.broadcast %0 : i32 to vector<8x8xi32>
      %28 = arith.addi %27, %26 : vector<8x8xi32>
      %29 = tpu.iota {dimensions = array<i32: 1>} : vector<8x8xi32>
      %30 = vector.broadcast %1 : i32 to vector<8x8xi32>
      %31 = arith.addi %30, %29 : vector<8x8xi32>
      %32 = arith.cmpi sle, %31, %28 : vector<8x8xi32>
      %33 = vector.extract_strided_slice %19 {offsets = [0, 0], sizes = [8, 8], strides = [1, 1]} : vector<8x32xf32> to vector<8x8xf32>
      %34 = vector.extract_strided_slice %21 {offsets = [0, 0], sizes = [8, 8], strides = [1, 1]} : vector<8x32xf32> to vector<8x8xf32>
      %35 = vector.extract_strided_slice %23 {offsets = [0, 0], sizes = [8, 8], strides = [1, 1]} : vector<8x32xf32> to vector<8x8xf32>
      %cst = arith.constant dense<0.000000e+00> : vector<8x8xf32>
      %36 = tpu.matmul %33, %34, %cst {dimension_numbers = #tpu.dot_dimension_numbers<[1], [1], [0], [0], [0, 0, 1, 0], [], []>} : vector<8x8xf32>, vector<8x8xf32>, vector<8x8xf32> -> vector<8x8xf32>
      %cst_20 = arith.constant 0.353553385 : f32
      %37 = vector.broadcast %cst_20 : f32 to vector<8x8xf32>
      %38 = arith.mulf %36, %37 : vector<8x8xf32>
      %39 = vector.broadcast %25 : vector<1x8xf32> to vector<8x8xf32>
      %40 = arith.addf %38, %39 : vector<8x8xf32>
      %c2_i32 = arith.constant 2 : i32
      %41 = vector.broadcast %c2_i32 : i32 to vector<8x8xi32>
      %42 = arith.subi %28, %41 : vector<8x8xi32>
      %43 = arith.cmpi sge, %31, %42 : vector<8x8xi32>
      %44 = arith.andi %32, %43 : vector<8x8xi1>
      %cst_21 = arith.constant -1.000000e+30 : f32
      %45 = vector.broadcast %cst_21 : f32 to vector<8x8xf32>
      %46 = arith.select %44, %40, %45 : vector<8x8xi1>, vector<8x8xf32>
      %c0_22 = arith.constant 0 : index
      %c0_23 = arith.constant 0 : index
      %c0_24 = arith.constant 0 : index
      %47 = vector.load %arg8[%c0_22, %c0_23, %c0_24] : memref<4x8x1xf32, #tpu.memory_space<vmem>>, vector<1x8x1xf32>
      %48 = vector.shape_cast %47 : vector<1x8x1xf32> to vector<8x1xf32>
      %cst_25 = arith.constant dense<0xFF800000> : vector<8xf32>
      %49 = vector.multi_reduction <maximumf>, %46, %cst_25 [1] : vector<8x8xf32> to vector<8xf32>
      %50 = vector.shape_cast %49 : vector<8xf32> to vector<8x1xf32>
      %51 = arith.maximumf %48, %50 : vector<8x1xf32>
      %52 = arith.subf %48, %51 : vector<8x1xf32>
      %53 = math.exp %52 : vector<8x1xf32>
      %54 = vector.broadcast %51 : vector<8x1xf32> to vector<8x8xf32>
      %55 = arith.subf %46, %54 : vector<8x8xf32>
      %56 = math.exp %55 : vector<8x8xf32>
      %c0_26 = arith.constant 0 : index
      %c0_27 = arith.constant 0 : index
      %c0_28 = arith.constant 0 : index
      %57 = vector.load %arg9[%c0_26, %c0_27, %c0_28] : memref<4x8x1xf32, #tpu.memory_space<vmem>>, vector<1x8x1xf32>
      %58 = vector.shape_cast %57 : vector<1x8x1xf32> to vector<8x1xf32>
      %59 = arith.mulf %53, %58 : vector<8x1xf32>
      %cst_29 = arith.constant dense<0.000000e+00> : vector<8xf32>
      %60 = vector.multi_reduction <add>, %56, %cst_29 [1] : vector<8x8xf32> to vector<8xf32>
      %61 = vector.shape_cast %60 : vector<8xf32> to vector<8x1xf32>
      %62 = arith.addf %59, %61 : vector<8x1xf32>
      %c0_30 = arith.constant 0 : index
      %c0_31 = arith.constant 0 : index
      %c0_32 = arith.constant 0 : index
      %63 = vector.load %arg9[%c0_30, %c0_31, %c0_32] : memref<4x8x1xf32, #tpu.memory_space<vmem>>, vector<1x8x1xf32>
      %64 = vector.shape_cast %63 : vector<1x8x1xf32> to vector<8x1xf32>
      %65 = vector.shape_cast %62 : vector<8x1xf32> to vector<1x8x1xf32>
      tpu.vector_store %arg9[%c0_30, %c0_31, %c0_32], %65 {strides = array<i32>} : memref<4x8x1xf32, #tpu.memory_space<vmem>>, vector<1x8x1xf32>,
      %c0_33 = arith.constant 0 : index
      %c0_34 = arith.constant 0 : index
      %c0_35 = arith.constant 0 : index
      %66 = vector.load %arg10[%c0_33, %c0_34, %c0_35] : memref<4x8x8xf32, #tpu.memory_space<vmem>>, vector<1x8x8xf32>
      %67 = vector.shape_cast %66 : vector<1x8x8xf32> to vector<8x8xf32>
      %68 = vector.broadcast %53 : vector<8x1xf32> to vector<8x8xf32>
      %69 = arith.mulf %68, %67 : vector<8x8xf32>
      %cst_36 = arith.constant dense<0.000000e+00> : vector<8x8xf32>
      %70 = tpu.matmul %56, %35, %cst_36 {dimension_numbers = #tpu.dot_dimension_numbers<[1], [0], [0], [1], [0, 0, 1, 1], [], []>} : vector<8x8xf32>, vector<8x8xf32>, vector<8x8xf32> -> vector<8x8xf32>
      %71 = arith.addf %69, %70 : vector<8x8xf32>
      %c0_37 = arith.constant 0 : index
      %c0_38 = arith.constant 0 : index
      %c0_39 = arith.constant 0 : index
      %72 = vector.load %arg10[%c0_37, %c0_38, %c0_39] : memref<4x8x8xf32, #tpu.memory_space<vmem>>, vector<1x8x8xf32>
      %73 = vector.shape_cast %72 : vector<1x8x8xf32> to vector<8x8xf32>
      %74 = vector.shape_cast %71 : vector<8x8xf32> to vector<1x8x8xf32>
      tpu.vector_store %arg10[%c0_37, %c0_38, %c0_39], %74 {strides = array<i32>} : memref<4x8x8xf32, #tpu.memory_space<vmem>>, vector<1x8x8xf32>,
      %c0_40 = arith.constant 0 : index
      %c0_41 = arith.constant 0 : index
      %c0_42 = arith.constant 0 : index
      %75 = vector.load %arg8[%c0_40, %c0_41, %c0_42] : memref<4x8x1xf32, #tpu.memory_space<vmem>>, vector<1x8x1xf32>
      %76 = vector.shape_cast %75 : vector<1x8x1xf32> to vector<8x1xf32>
      %77 = vector.shape_cast %51 : vector<8x1xf32> to vector<1x8x1xf32>
      tpu.vector_store %arg8[%c0_40, %c0_41, %c0_42], %77 {strides = array<i32>} : memref<4x8x1xf32, #tpu.memory_space<vmem>>, vector<1x8x1xf32>,
      %78 = vector.extract_strided_slice %19 {offsets = [0, 8], sizes = [8, 8], strides = [1, 1]} : vector<8x32xf32> to vector<8x8xf32>
      %79 = vector.extract_strided_slice %21 {offsets = [0, 8], sizes = [8, 8], strides = [1, 1]} : vector<8x32xf32> to vector<8x8xf32>
      %80 = vector.extract_strided_slice %23 {offsets = [0, 8], sizes = [8, 8], strides = [1, 1]} : vector<8x32xf32> to vector<8x8xf32>
      %cst_43 = arith.constant dense<0.000000e+00> : vector<8x8xf32>
      %81 = tpu.matmul %78, %79, %cst_43 {dimension_numbers = #tpu.dot_dimension_numbers<[1], [1], [0], [0], [0, 0, 1, 0], [], []>} : vector<8x8xf32>, vector<8x8xf32>, vector<8x8xf32> -> vector<8x8xf32>
      %cst_44 = arith.constant 0.353553385 : f32
      %82 = vector.broadcast %cst_44 : f32 to vector<8x8xf32>
      %83 = arith.mulf %81, %82 : vector<8x8xf32>
      %84 = vector.broadcast %25 : vector<1x8xf32> to vector<8x8xf32>
      %85 = arith.addf %83, %84 : vector<8x8xf32>
      %c4_i32 = arith.constant 4 : i32
      %86 = vector.broadcast %c4_i32 : i32 to vector<8x8xi32>
      %87 = arith.subi %28, %86 : vector<8x8xi32>
      %88 = arith.cmpi sge, %31, %87 : vector<8x8xi32>
      %89 = arith.andi %32, %88 : vector<8x8xi1>
      %cst_45 = arith.constant -1.000000e+30 : f32
      %90 = vector.broadcast %cst_45 : f32 to vector<8x8xf32>
      %91 = arith.select %89, %85, %90 : vector<8x8xi1>, vector<8x8xf32>
      %c1 = arith.constant 1 : index
      %c0_46 = arith.constant 0 : index
      %c0_47 = arith.constant 0 : index
      %92 = vector.load %arg8[%c1, %c0_46, %c0_47] : memref<4x8x1xf32, #tpu.memory_space<vmem>>, vector<1x8x1xf32>
      %93 = vector.shape_cast %92 : vector<1x8x1xf32> to vector<8x1xf32>
      %cst_48 = arith.constant dense<0xFF800000> : vector<8xf32>
      %94 = vector.multi_reduction <maximumf>, %91, %cst_48 [1] : vector<8x8xf32> to vector<8xf32>
      %95 = vector.shape_cast %94 : vector<8xf32> to vector<8x1xf32>
      %96 = arith.maximumf %93, %95 : vector<8x1xf32>
      %97 = arith.subf %93, %96 : vector<8x1xf32>
      %98 = math.exp %97 : vector<8x1xf32>
      %99 = vector.broadcast %96 : vector<8x1xf32> to vector<8x8xf32>
      %100 = arith.subf %91, %99 : vector<8x8xf32>
      %101 = math.exp %100 : vector<8x8xf32>
      %c1_49 = arith.constant 1 : index
      %c0_50 = arith.constant 0 : index
      %c0_51 = arith.constant 0 : index
      %102 = vector.load %arg9[%c1_49, %c0_50, %c0_51] : memref<4x8x1xf32, #tpu.memory_space<vmem>>, vector<1x8x1xf32>
      %103 = vector.shape_cast %102 : vector<1x8x1xf32> to vector<8x1xf32>
      %104 = arith.mulf %98, %103 : vector<8x1xf32>
      %cst_52 = arith.constant dense<0.000000e+00> : vector<8xf32>
      %105 = vector.multi_reduction <add>, %101, %cst_52 [1] : vector<8x8xf32> to vector<8xf32>
      %106 = vector.shape_cast %105 : vector<8xf32> to vector<8x1xf32>
      %107 = arith.addf %104, %106 : vector<8x1xf32>
      %c1_53 = arith.constant 1 : index
      %c0_54 = arith.constant 0 : index
      %c0_55 = arith.constant 0 : index
      %108 = vector.load %arg9[%c1_53, %c0_54, %c0_55] : memref<4x8x1xf32, #tpu.memory_space<vmem>>, vector<1x8x1xf32>
      %109 = vector.shape_cast %108 : vector<1x8x1xf32> to vector<8x1xf32>
      %110 = vector.shape_cast %107 : vector<8x1xf32> to vector<1x8x1xf32>
      tpu.vector_store %arg9[%c1_53, %c0_54, %c0_55], %110 {strides = array<i32>} : memref<4x8x1xf32, #tpu.memory_space<vmem>>, vector<1x8x1xf32>,
      %c1_56 = arith.constant 1 : index
      %c0_57 = arith.constant 0 : index
      %c0_58 = arith.constant 0 : index
      %111 = vector.load %arg10[%c1_56, %c0_57, %c0_58] : memref<4x8x8xf32, #tpu.memory_space<vmem>>, vector<1x8x8xf32>
      %112 = vector.shape_cast %111 : vector<1x8x8xf32> to vector<8x8xf32>
      %113 = vector.broadcast %98 : vector<8x1xf32> to vector<8x8xf32>
      %114 = arith.mulf %113, %112 : vector<8x8xf32>
      %cst_59 = arith.constant dense<0.000000e+00> : vector<8x8xf32>
      %115 = tpu.matmul %101, %80, %cst_59 {dimension_numbers = #tpu.dot_dimension_numbers<[1], [0], [0], [1], [0, 0, 1, 1], [], []>} : vector<8x8xf32>, vector<8x8xf32>, vector<8x8xf32> -> vector<8x8xf32>
      %116 = arith.addf %114, %115 : vector<8x8xf32>
      %c1_60 = arith.constant 1 : index
      %c0_61 = arith.constant 0 : index
      %c0_62 = arith.constant 0 : index
      %117 = vector.load %arg10[%c1_60, %c0_61, %c0_62] : memref<4x8x8xf32, #tpu.memory_space<vmem>>, vector<1x8x8xf32>
      %118 = vector.shape_cast %117 : vector<1x8x8xf32> to vector<8x8xf32>
      %119 = vector.shape_cast %116 : vector<8x8xf32> to vector<1x8x8xf32>
      tpu.vector_store %arg10[%c1_60, %c0_61, %c0_62], %119 {strides = array<i32>} : memref<4x8x8xf32, #tpu.memory_space<vmem>>, vector<1x8x8xf32>,
      %c1_63 = arith.constant 1 : index
      %c0_64 = arith.constant 0 : index
      %c0_65 = arith.constant 0 : index
      %120 = vector.load %arg8[%c1_63, %c0_64, %c0_65] : memref<4x8x1xf32, #tpu.memory_space<vmem>>, vector<1x8x1xf32>
      %121 = vector.shape_cast %120 : vector<1x8x1xf32> to vector<8x1xf32>
      %122 = vector.shape_cast %96 : vector<8x1xf32> to vector<1x8x1xf32>
      tpu.vector_store %arg8[%c1_63, %c0_64, %c0_65], %122 {strides = array<i32>} : memref<4x8x1xf32, #tpu.memory_space<vmem>>, vector<1x8x1xf32>,
      %123 = vector.extract_strided_slice %19 {offsets = [0, 16], sizes = [8, 8], strides = [1, 1]} : vector<8x32xf32> to vector<8x8xf32>
      %124 = vector.extract_strided_slice %21 {offsets = [0, 16], sizes = [8, 8], strides = [1, 1]} : vector<8x32xf32> to vector<8x8xf32>
      %125 = vector.extract_strided_slice %23 {offsets = [0, 16], sizes = [8, 8], strides = [1, 1]} : vector<8x32xf32> to vector<8x8xf32>
      %cst_66 = arith.constant dense<0.000000e+00> : vector<8x8xf32>
      %126 = tpu.matmul %123, %124, %cst_66 {dimension_numbers = #tpu.dot_dimension_numbers<[1], [1], [0], [0], [0, 0, 1, 0], [], []>} : vector<8x8xf32>, vector<8x8xf32>, vector<8x8xf32> -> vector<8x8xf32>
      %cst_67 = arith.constant 0.353553385 : f32
      %127 = vector.broadcast %cst_67 : f32 to vector<8x8xf32>
      %128 = arith.mulf %126, %127 : vector<8x8xf32>
      %129 = vector.broadcast %25 : vector<1x8xf32> to vector<8x8xf32>
      %130 = arith.addf %128, %129 : vector<8x8xf32>
      %c6_i32 = arith.constant 6 : i32
      %131 = vector.broadcast %c6_i32 : i32 to vector<8x8xi32>
      %132 = arith.subi %28, %131 : vector<8x8xi32>
      %133 = arith.cmpi sge, %31, %132 : vector<8x8xi32>
      %134 = arith.andi %32, %133 : vector<8x8xi1>
      %cst_68 = arith.constant -1.000000e+30 : f32
      %135 = vector.broadcast %cst_68 : f32 to vector<8x8xf32>
      %136 = arith.select %134, %130, %135 : vector<8x8xi1>, vector<8x8xf32>
      %c2 = arith.constant 2 : index
      %c0_69 = arith.constant 0 : index
      %c0_70 = arith.constant 0 : index
      %137 = vector.load %arg8[%c2, %c0_69, %c0_70] : memref<4x8x1xf32, #tpu.memory_space<vmem>>, vector<1x8x1xf32>
      %138 = vector.shape_cast %137 : vector<1x8x1xf32> to vector<8x1xf32>
      %cst_71 = arith.constant dense<0xFF800000> : vector<8xf32>
      %139 = vector.multi_reduction <maximumf>, %136, %cst_71 [1] : vector<8x8xf32> to vector<8xf32>
      %140 = vector.shape_cast %139 : vector<8xf32> to vector<8x1xf32>
      %141 = arith.maximumf %138, %140 : vector<8x1xf32>
      %142 = arith.subf %138, %141 : vector<8x1xf32>
      %143 = math.exp %142 : vector<8x1xf32>
      %144 = vector.broadcast %141 : vector<8x1xf32> to vector<8x8xf32>
      %145 = arith.subf %136, %144 : vector<8x8xf32>
      %146 = math.exp %145 : vector<8x8xf32>
      %c2_72 = arith.constant 2 : index
      %c0_73 = arith.constant 0 : index
      %c0_74 = arith.constant 0 : index
      %147 = vector.load %arg9[%c2_72, %c0_73, %c0_74] : memref<4x8x1xf32, #tpu.memory_space<vmem>>, vector<1x8x1xf32>
      %148 = vector.shape_cast %147 : vector<1x8x1xf32> to vector<8x1xf32>
      %149 = arith.mulf %143, %148 : vector<8x1xf32>
      %cst_75 = arith.constant dense<0.000000e+00> : vector<8xf32>
      %150 = vector.multi_reduction <add>, %146, %cst_75 [1] : vector<8x8xf32> to vector<8xf32>
      %151 = vector.shape_cast %150 : vector<8xf32> to vector<8x1xf32>
      %152 = arith.addf %149, %151 : vector<8x1xf32>
      %c2_76 = arith.constant 2 : index
      %c0_77 = arith.constant 0 : index
      %c0_78 = arith.constant 0 : index
      %153 = vector.load %arg9[%c2_76, %c0_77, %c0_78] : memref<4x8x1xf32, #tpu.memory_space<vmem>>, vector<1x8x1xf32>
      %154 = vector.shape_cast %153 : vector<1x8x1xf32> to vector<8x1xf32>
      %155 = vector.shape_cast %152 : vector<8x1xf32> to vector<1x8x1xf32>
      tpu.vector_store %arg9[%c2_76, %c0_77, %c0_78], %155 {strides = array<i32>} : memref<4x8x1xf32, #tpu.memory_space<vmem>>, vector<1x8x1xf32>,
      %c2_79 = arith.constant 2 : index
      %c0_80 = arith.constant 0 : index
      %c0_81 = arith.constant 0 : index
      %156 = vector.load %arg10[%c2_79, %c0_80, %c0_81] : memref<4x8x8xf32, #tpu.memory_space<vmem>>, vector<1x8x8xf32>
      %157 = vector.shape_cast %156 : vector<1x8x8xf32> to vector<8x8xf32>
      %158 = vector.broadcast %143 : vector<8x1xf32> to vector<8x8xf32>
      %159 = arith.mulf %158, %157 : vector<8x8xf32>
      %cst_82 = arith.constant dense<0.000000e+00> : vector<8x8xf32>
      %160 = tpu.matmul %146, %125, %cst_82 {dimension_numbers = #tpu.dot_dimension_numbers<[1], [0], [0], [1], [0, 0, 1, 1], [], []>} : vector<8x8xf32>, vector<8x8xf32>, vector<8x8xf32> -> vector<8x8xf32>
      %161 = arith.addf %159, %160 : vector<8x8xf32>
      %c2_83 = arith.constant 2 : index
      %c0_84 = arith.constant 0 : index
      %c0_85 = arith.constant 0 : index
      %162 = vector.load %arg10[%c2_83, %c0_84, %c0_85] : memref<4x8x8xf32, #tpu.memory_space<vmem>>, vector<1x8x8xf32>
      %163 = vector.shape_cast %162 : vector<1x8x8xf32> to vector<8x8xf32>
      %164 = vector.shape_cast %161 : vector<8x8xf32> to vector<1x8x8xf32>
      tpu.vector_store %arg10[%c2_83, %c0_84, %c0_85], %164 {strides = array<i32>} : memref<4x8x8xf32, #tpu.memory_space<vmem>>, vector<1x8x8xf32>,
      %c2_86 = arith.constant 2 : index
      %c0_87 = arith.constant 0 : index
      %c0_88 = arith.constant 0 : index
      %165 = vector.load %arg8[%c2_86, %c0_87, %c0_88] : memref<4x8x1xf32, #tpu.memory_space<vmem>>, vector<1x8x1xf32>
      %166 = vector.shape_cast %165 : vector<1x8x1xf32> to vector<8x1xf32>
      %167 = vector.shape_cast %141 : vector<8x1xf32> to vector<1x8x1xf32>
      tpu.vector_store %arg8[%c2_86, %c0_87, %c0_88], %167 {strides = array<i32>} : memref<4x8x1xf32, #tpu.memory_space<vmem>>, vector<1x8x1xf32>,
      %168 = vector.extract_strided_slice %19 {offsets = [0, 24], sizes = [8, 8], strides = [1, 1]} : vector<8x32xf32> to vector<8x8xf32>
      %169 = vector.extract_strided_slice %21 {offsets = [0, 24], sizes = [8, 8], strides = [1, 1]} : vector<8x32xf32> to vector<8x8xf32>
      %170 = vector.extract_strided_slice %23 {offsets = [0, 24], sizes = [8, 8], strides = [1, 1]} : vector<8x32xf32> to vector<8x8xf32>
      %cst_89 = arith.constant dense<0.000000e+00> : vector<8x8xf32>
      %171 = tpu.matmul %168, %169, %cst_89 {dimension_numbers = #tpu.dot_dimension_numbers<[1], [1], [0], [0], [0, 0, 1, 0], [], []>} : vector<8x8xf32>, vector<8x8xf32>, vector<8x8xf32> -> vector<8x8xf32>
      %cst_90 = arith.constant 0.353553385 : f32
      %172 = vector.broadcast %cst_90 : f32 to vector<8x8xf32>
      %173 = arith.mulf %171, %172 : vector<8x8xf32>
      %174 = vector.broadcast %25 : vector<1x8xf32> to vector<8x8xf32>
      %175 = arith.addf %173, %174 : vector<8x8xf32>
      %c8_i32_91 = arith.constant 8 : i32
      %176 = vector.broadcast %c8_i32_91 : i32 to vector<8x8xi32>
      %177 = arith.subi %28, %176 : vector<8x8xi32>
      %178 = arith.cmpi sge, %31, %177 : vector<8x8xi32>
      %179 = arith.andi %32, %178 : vector<8x8xi1>
      %cst_92 = arith.constant -1.000000e+30 : f32
      %180 = vector.broadcast %cst_92 : f32 to vector<8x8xf32>
      %181 = arith.select %179, %175, %180 : vector<8x8xi1>, vector<8x8xf32>
      %c3 = arith.constant 3 : index
      %c0_93 = arith.constant 0 : index
      %c0_94 = arith.constant 0 : index
      %182 = vector.load %arg8[%c3, %c0_93, %c0_94] : memref<4x8x1xf32, #tpu.memory_space<vmem>>, vector<1x8x1xf32>
      %183 = vector.shape_cast %182 : vector<1x8x1xf32> to vector<8x1xf32>
      %cst_95 = arith.constant dense<0xFF800000> : vector<8xf32>
      %184 = vector.multi_reduction <maximumf>, %181, %cst_95 [1] : vector<8x8xf32> to vector<8xf32>
      %185 = vector.shape_cast %184 : vector<8xf32> to vector<8x1xf32>
      %186 = arith.maximumf %183, %185 : vector<8x1xf32>
      %187 = arith.subf %183, %186 : vector<8x1xf32>
      %188 = math.exp %187 : vector<8x1xf32>
      %189 = vector.broadcast %186 : vector<8x1xf32> to vector<8x8xf32>
      %190 = arith.subf %181, %189 : vector<8x8xf32>
      %191 = math.exp %190 : vector<8x8xf32>
      %c3_96 = arith.constant 3 : index
      %c0_97 = arith.constant 0 : index
      %c0_98 = arith.constant 0 : index
      %192 = vector.load %arg9[%c3_96, %c0_97, %c0_98] : memref<4x8x1xf32, #tpu.memory_space<vmem>>, vector<1x8x1xf32>
      %193 = vector.shape_cast %192 : vector<1x8x1xf32> to vector<8x1xf32>
      %194 = arith.mulf %188, %193 : vector<8x1xf32>
      %cst_99 = arith.constant dense<0.000000e+00> : vector<8xf32>
      %195 = vector.multi_reduction <add>, %191, %cst_99 [1] : vector<8x8xf32> to vector<8xf32>
      %196 = vector.shape_cast %195 : vector<8xf32> to vector<8x1xf32>
      %197 = arith.addf %194, %196 : vector<8x1xf32>
      %c3_100 = arith.constant 3 : index
      %c0_101 = arith.constant 0 : index
      %c0_102 = arith.constant 0 : index
      %198 = vector.load %arg9[%c3_100, %c0_101, %c0_102] : memref<4x8x1xf32, #tpu.memory_space<vmem>>, vector<1x8x1xf32>
      %199 = vector.shape_cast %198 : vector<1x8x1xf32> to vector<8x1xf32>
      %200 = vector.shape_cast %197 : vector<8x1xf32> to vector<1x8x1xf32>
      tpu.vector_store %arg9[%c3_100, %c0_101, %c0_102], %200 {strides = array<i32>} : memref<4x8x1xf32, #tpu.memory_space<vmem>>, vector<1x8x1xf32>,
      %c3_103 = arith.constant 3 : index
      %c0_104 = arith.constant 0 : index
      %c0_105 = arith.constant 0 : index
      %201 = vector.load %arg10[%c3_103, %c0_104, %c0_105] : memref<4x8x8xf32, #tpu.memory_space<vmem>>, vector<1x8x8xf32>
      %202 = vector.shape_cast %201 : vector<1x8x8xf32> to vector<8x8xf32>
      %203 = vector.broadcast %188 : vector<8x1xf32> to vector<8x8xf32>
      %204 = arith.mulf %203, %202 : vector<8x8xf32>
      %cst_106 = arith.constant dense<0.000000e+00> : vector<8x8xf32>
      %205 = tpu.matmul %191, %170, %cst_106 {dimension_numbers = #tpu.dot_dimension_numbers<[1], [0], [0], [1], [0, 0, 1, 1], [], []>} : vector<8x8xf32>, vector<8x8xf32>, vector<8x8xf32> -> vector<8x8xf32>
      %206 = arith.addf %204, %205 : vector<8x8xf32>
      %c3_107 = arith.constant 3 : index
      %c0_108 = arith.constant 0 : index
      %c0_109 = arith.constant 0 : index
      %207 = vector.load %arg10[%c3_107, %c0_108, %c0_109] : memref<4x8x8xf32, #tpu.memory_space<vmem>>, vector<1x8x8xf32>
      %208 = vector.shape_cast %207 : vector<1x8x8xf32> to vector<8x8xf32>
      %209 = vector.shape_cast %206 : vector<8x8xf32> to vector<1x8x8xf32>
      tpu.vector_store %arg10[%c3_107, %c0_108, %c0_109], %209 {strides = array<i32>} : memref<4x8x8xf32, #tpu.memory_space<vmem>>, vector<1x8x8xf32>,
      %c3_110 = arith.constant 3 : index
      %c0_111 = arith.constant 0 : index
      %c0_112 = arith.constant 0 : index
      %210 = vector.load %arg8[%c3_110, %c0_111, %c0_112] : memref<4x8x1xf32, #tpu.memory_space<vmem>>, vector<1x8x1xf32>
      %211 = vector.shape_cast %210 : vector<1x8x1xf32> to vector<8x1xf32>
      %212 = vector.shape_cast %186 : vector<8x1xf32> to vector<1x8x1xf32>
      tpu.vector_store %arg8[%c3_110, %c0_111, %c0_112], %212 {strides = array<i32>} : memref<4x8x1xf32, #tpu.memory_space<vmem>>, vector<1x8x1xf32>,
    } else {
    }
    %c0_i32_7 = arith.constant 0 : i32
    %15 = arith.cmpi eq, %arg2, %c0_i32_7 : i32
    %16 = arith.extui %15 : i1 to i32
    %c0_i32_8 = arith.constant 0 : i32
    %17 = arith.cmpi ne, %16, %c0_i32_8 : i32
    scf.if %17 {
      %c0 = arith.constant 0 : index
      %c0_9 = arith.constant 0 : index
      %c0_10 = arith.constant 0 : index
      %18 = vector.load %arg9[%c0, %c0_9, %c0_10] : memref<4x8x1xf32, #tpu.memory_space<vmem>>, vector<1x8x1xf32>
      %19 = vector.shape_cast %18 : vector<1x8x1xf32> to vector<8x1xf32>
      %20 = tpu.reciprocal %19 {approx = true} : vector<8x1xf32> -> vector<8x1xf32>
      %c0_11 = arith.constant 0 : index
      %c0_12 = arith.constant 0 : index
      %c0_13 = arith.constant 0 : index
      %21 = vector.load %arg10[%c0_11, %c0_12, %c0_13] : memref<4x8x8xf32, #tpu.memory_space<vmem>>, vector<1x8x8xf32>
      %22 = vector.shape_cast %21 : vector<1x8x8xf32> to vector<8x8xf32>
      %23 = vector.broadcast %20 : vector<8x1xf32> to vector<8x8xf32>
      %24 = arith.mulf %22, %23 : vector<8x8xf32>
      %c1 = arith.constant 1 : index
      %c0_14 = arith.constant 0 : index
      %c0_15 = arith.constant 0 : index
      %25 = vector.load %arg9[%c1, %c0_14, %c0_15] : memref<4x8x1xf32, #tpu.memory_space<vmem>>, vector<1x8x1xf32>
      %26 = vector.shape_cast %25 : vector<1x8x1xf32> to vector<8x1xf32>
      %27 = tpu.reciprocal %26 {approx = true} : vector<8x1xf32> -> vector<8x1xf32>
      %c1_16 = arith.constant 1 : index
      %c0_17 = arith.constant 0 : index
      %c0_18 = arith.constant 0 : index
      %28 = vector.load %arg10[%c1_16, %c0_17, %c0_18] : memref<4x8x8xf32, #tpu.memory_space<vmem>>, vector<1x8x8xf32>
      %29 = vector.shape_cast %28 : vector<1x8x8xf32> to vector<8x8xf32>
      %30 = vector.broadcast %27 : vector<8x1xf32> to vector<8x8xf32>
      %31 = arith.mulf %29, %30 : vector<8x8xf32>
      %c2 = arith.constant 2 : index
      %c0_19 = arith.constant 0 : index
      %c0_20 = arith.constant 0 : index
      %32 = vector.load %arg9[%c2, %c0_19, %c0_20] : memref<4x8x1xf32, #tpu.memory_space<vmem>>, vector<1x8x1xf32>
      %33 = vector.shape_cast %32 : vector<1x8x1xf32> to vector<8x1xf32>
      %34 = tpu.reciprocal %33 {approx = true} : vector<8x1xf32> -> vector<8x1xf32>
      %c2_21 = arith.constant 2 : index
      %c0_22 = arith.constant 0 : index
      %c0_23 = arith.constant 0 : index
      %35 = vector.load %arg10[%c2_21, %c0_22, %c0_23] : memref<4x8x8xf32, #tpu.memory_space<vmem>>, vector<1x8x8xf32>
      %36 = vector.shape_cast %35 : vector<1x8x8xf32> to vector<8x8xf32>
      %37 = vector.broadcast %34 : vector<8x1xf32> to vector<8x8xf32>
      %38 = arith.mulf %36, %37 : vector<8x8xf32>
      %c3 = arith.constant 3 : index
      %c0_24 = arith.constant 0 : index
      %c0_25 = arith.constant 0 : index
      %39 = vector.load %arg9[%c3, %c0_24, %c0_25] : memref<4x8x1xf32, #tpu.memory_space<vmem>>, vector<1x8x1xf32>
      %40 = vector.shape_cast %39 : vector<1x8x1xf32> to vector<8x1xf32>
      %41 = tpu.reciprocal %40 {approx = true} : vector<8x1xf32> -> vector<8x1xf32>
      %c3_26 = arith.constant 3 : index
      %c0_27 = arith.constant 0 : index
      %c0_28 = arith.constant 0 : index
      %42 = vector.load %arg10[%c3_26, %c0_27, %c0_28] : memref<4x8x8xf32, #tpu.memory_space<vmem>>, vector<1x8x8xf32>
      %43 = vector.shape_cast %42 : vector<1x8x8xf32> to vector<8x8xf32>
      %44 = vector.broadcast %41 : vector<8x1xf32> to vector<8x8xf32>
      %45 = arith.mulf %43, %44 : vector<8x8xf32>
      %46 = tpu.concatenate %24, %31, %38, %45 in 1 : vector<8x8xf32>, vector<8x8xf32>, vector<8x8xf32>, vector<8x8xf32> -> vector<8x32xf32>
      %c0_29 = arith.constant 0 : index
      %c0_30 = arith.constant 0 : index
      %c0_31 = arith.constant 0 : index
      %47 = vector.load %arg7[%c0_29, %c0_30, %c0_31] : memref<1x8x32xf32, #tpu.memory_space<vmem>>, vector<1x8x32xf32>
      %48 = vector.shape_cast %47 : vector<1x8x32xf32> to vector<8x32xf32>
      %49 = vector.shape_cast %46 : vector<8x32xf32> to vector<1x8x32xf32>
      tpu.vector_store %arg7[%c0_29, %c0_30, %c0_31], %49 {strides = array<i32>} : memref<1x8x32xf32, #tpu.memory_space<vmem>>, vector<1x8x32xf32>,
    } else {
    }
    return
  }
  func.func @transform_0(%arg0: i32, %arg1: i32, %arg2: i32) -> (i32, i32, i32) {
    %c0_i32 = arith.constant 0 : i32
    %c0_i32_0 = arith.constant 0 : i32
    return %arg0, %arg1, %c0_i32 : i32, i32, i32
  }
  func.func @transform_1(%arg0: i32, %arg1: i32, %arg2: i32) -> (i32, i32, i32) {
    %c0_i32 = arith.constant 0 : i32
    %c0_i32_0 = arith.constant 0 : i32
    return %arg0, %arg2, %c0_i32 : i32, i32, i32
  }
  func.func @transform_2(%arg0: i32, %arg1: i32, %arg2: i32) -> (i32, i32, i32) {
    %c0_i32 = arith.constant 0 : i32
    %c0_i32_0 = arith.constant 0 : i32
    return %arg0, %arg2, %c0_i32 : i32, i32, i32
  }
  func.func @transform_3(%arg0: i32, %arg1: i32, %arg2: i32) -> (i32, i32, i32) {
    %c0_i32 = arith.constant 0 : i32
    %c0_i32_0 = arith.constant 0 : i32
    return %arg0, %c0_i32, %arg2 : i32, i32, i32
  }
  func.func @transform_4(%arg0: i32, %arg1: i32, %arg2: i32) -> (i32, i32, i32) {
    %c0_i32 = arith.constant 0 : i32
    %c0_i32_0 = arith.constant 0 : i32
    return %arg0, %arg1, %c0_i32 : i32, i32, i32
  }
}

module attributes {stable_mosaic.version = 11 : i64} {
  func.func @_ln_kernel(%arg0: i32, %arg1: memref<16x32xf32, #tpu.memory_space<vmem>>, %arg2: memref<1x32xf32, #tpu.memory_space<vmem>>, %arg3: memref<1x32xf32, #tpu.memory_space<vmem>>, %arg4: memref<16x32xf32, #tpu.memory_space<vmem>>) attributes {dimension_semantics = [#tpu.dimension_semantics<parallel>], iteration_bounds = array<i64: 1>, scalar_prefetch = 0 : i64, scratch_operands = 0 : i64, tpu.core_type = #tpu.core_type<tc>, window_params = [{transform_indices = @transform_0, window_bounds = array<i64: 16, 32>}, {pipeline_mode = #tpu.pipeline_mode<synchronous>, transform_indices = @transform_1, window_bounds = array<i64: 1, 32>}, {pipeline_mode = #tpu.pipeline_mode<synchronous>, transform_indices = @transform_2, window_bounds = array<i64: 1, 32>}, {transform_indices = @transform_3, window_bounds = array<i64: 16, 32>}]} {
    %c0 = arith.constant 0 : index
    %c0_0 = arith.constant 0 : index
    %0 = vector.load %arg1[%c0, %c0_0] : memref<16x32xf32, #tpu.memory_space<vmem>>, vector<16x32xf32>
    %c0_1 = arith.constant 0 : index
    %c0_2 = arith.constant 0 : index
    %1 = vector.load %arg2[%c0_1, %c0_2] : memref<1x32xf32, #tpu.memory_space<vmem>>, vector<1x32xf32>
    %c0_3 = arith.constant 0 : index
    %c0_4 = arith.constant 0 : index
    %2 = vector.load %arg3[%c0_3, %c0_4] : memref<1x32xf32, #tpu.memory_space<vmem>>, vector<1x32xf32>
    %cst = arith.constant dense<0.000000e+00> : vector<16xf32>
    %3 = vector.multi_reduction <add>, %0, %cst [1] : vector<16x32xf32> to vector<16xf32>
    %4 = vector.shape_cast %3 : vector<16xf32> to vector<16x1xf32>
    %cst_5 = arith.constant 3.200000e+01 : f32
    %5 = vector.broadcast %cst_5 : f32 to vector<16x1xf32>
    %6 = arith.divf %4, %5 : vector<16x1xf32>
    %7 = vector.broadcast %6 : vector<16x1xf32> to vector<16x32xf32>
    %8 = arith.subf %0, %7 : vector<16x32xf32>
    %9 = arith.mulf %8, %8 : vector<16x32xf32>
    %cst_6 = arith.constant dense<0.000000e+00> : vector<16xf32>
    %10 = vector.multi_reduction <add>, %9, %cst_6 [1] : vector<16x32xf32> to vector<16xf32>
    %11 = vector.shape_cast %10 : vector<16xf32> to vector<16x1xf32>
    %cst_7 = arith.constant 3.200000e+01 : f32
    %12 = vector.broadcast %cst_7 : f32 to vector<16x1xf32>
    %13 = arith.divf %11, %12 : vector<16x1xf32>
    %14 = vector.broadcast %6 : vector<16x1xf32> to vector<16x32xf32>
    %15 = arith.subf %0, %14 : vector<16x32xf32>
    %cst_8 = arith.constant 9.99999974E-6 : f32
    %16 = vector.broadcast %cst_8 : f32 to vector<16x1xf32>
    %17 = arith.addf %13, %16 : vector<16x1xf32>
    %18 = math.rsqrt %17 : vector<16x1xf32>
    %19 = vector.broadcast %18 : vector<16x1xf32> to vector<16x32xf32>
    %20 = arith.mulf %15, %19 : vector<16x32xf32>
    %21 = vector.broadcast %1 : vector<1x32xf32> to vector<16x32xf32>
    %22 = arith.mulf %20, %21 : vector<16x32xf32>
    %23 = vector.broadcast %2 : vector<1x32xf32> to vector<16x32xf32>
    %24 = arith.addf %22, %23 : vector<16x32xf32>
    %c0_9 = arith.constant 0 : index
    %c0_10 = arith.constant 0 : index
    %25 = vector.load %arg4[%c0_9, %c0_10] : memref<16x32xf32, #tpu.memory_space<vmem>>, vector<16x32xf32>
    tpu.vector_store %arg4[%c0_9, %c0_10], %24 {strides = array<i32>} : memref<16x32xf32, #tpu.memory_space<vmem>>, vector<16x32xf32>,
    return
  }
  func.func @transform_0(%arg0: i32) -> (i32, i32) {
    %c0_i32 = arith.constant 0 : i32
    %c0_i32_0 = arith.constant 0 : i32
    return %arg0, %c0_i32 : i32, i32
  }
  func.func @transform_1(%arg0: i32) -> (i32, i32) {
    %c0_i32 = arith.constant 0 : i32
    %c0_i32_0 = arith.constant 0 : i32
    %c0_i32_1 = arith.constant 0 : i32
    return %c0_i32, %c0_i32_0 : i32, i32
  }
  func.func @transform_2(%arg0: i32) -> (i32, i32) {
    %c0_i32 = arith.constant 0 : i32
    %c0_i32_0 = arith.constant 0 : i32
    %c0_i32_1 = arith.constant 0 : i32
    return %c0_i32, %c0_i32_0 : i32, i32
  }
  func.func @transform_3(%arg0: i32) -> (i32, i32) {
    %c0_i32 = arith.constant 0 : i32
    %c0_i32_0 = arith.constant 0 : i32
    return %arg0, %c0_i32 : i32, i32
  }
}

module attributes {stable_mosaic.version = 11 : i64} {
  func.func @_linear_kernel(%arg0: i32, %arg1: i32, %arg2: i32, %arg3: memref<16x32xf32, #tpu.memory_space<vmem>>, %arg4: memref<32x64xf32, #tpu.memory_space<vmem>>, %arg5: memref<16x64xf32, #tpu.memory_space<vmem>>, %arg6: memref<16x64xf32, #tpu.memory_space<vmem>>) attributes {dimension_semantics = [#tpu.dimension_semantics<parallel>, #tpu.dimension_semantics<parallel>, #tpu.dimension_semantics<arbitrary>], iteration_bounds = array<i64: 1, 1, 1>, scalar_prefetch = 0 : i64, scratch_operands = 1 : i64, tpu.core_type = #tpu.core_type<tc>, window_params = [{transform_indices = @transform_0, window_bounds = array<i64: 16, 32>}, {transform_indices = @transform_1, window_bounds = array<i64: 32, 64>}, {transform_indices = @transform_2, window_bounds = array<i64: 16, 64>}]} {
    %c0_i32 = arith.constant 0 : i32
    %0 = arith.cmpi eq, %arg2, %c0_i32 : i32
    %1 = arith.extui %0 : i1 to i32
    %c0_i32_0 = arith.constant 0 : i32
    %2 = arith.cmpi ne, %1, %c0_i32_0 : i32
    scf.if %2 {
      %cst_10 = arith.constant 0.000000e+00 : f32
      %12 = vector.broadcast %cst_10 : f32 to vector<16x64xf32>
      %c0_11 = arith.constant 0 : index
      %c0_12 = arith.constant 0 : index
      %13 = vector.load %arg6[%c0_11, %c0_12] : memref<16x64xf32, #tpu.memory_space<vmem>>, vector<16x64xf32>
      tpu.vector_store %arg6[%c0_11, %c0_12], %12 {strides = array<i32>} : memref<16x64xf32, #tpu.memory_space<vmem>>, vector<16x64xf32>,
    } else {
    }
    %c0 = arith.constant 0 : index
    %c0_1 = arith.constant 0 : index
    %3 = vector.load %arg6[%c0, %c0_1] : memref<16x64xf32, #tpu.memory_space<vmem>>, vector<16x64xf32>
    %c0_2 = arith.constant 0 : index
    %c0_3 = arith.constant 0 : index
    %4 = vector.load %arg3[%c0_2, %c0_3] : memref<16x32xf32, #tpu.memory_space<vmem>>, vector<16x32xf32>
    %c0_4 = arith.constant 0 : index
    %c0_5 = arith.constant 0 : index
    %5 = vector.load %arg4[%c0_4, %c0_5] : memref<32x64xf32, #tpu.memory_space<vmem>>, vector<32x64xf32>
    %cst = arith.constant dense<0.000000e+00> : vector<16x64xf32>
    %6 = tpu.matmul %4, %5, %cst {dimension_numbers = #tpu.dot_dimension_numbers<[1], [0], [0], [1], [0, 0, 1, 1], [], []>} : vector<16x32xf32>, vector<32x64xf32>, vector<16x64xf32> -> vector<16x64xf32>
    %7 = arith.addf %3, %6 : vector<16x64xf32>
    %c0_6 = arith.constant 0 : index
    %c0_7 = arith.constant 0 : index
    %8 = vector.load %arg6[%c0_6, %c0_7] : memref<16x64xf32, #tpu.memory_space<vmem>>, vector<16x64xf32>
    tpu.vector_store %arg6[%c0_6, %c0_7], %7 {strides = array<i32>} : memref<16x64xf32, #tpu.memory_space<vmem>>, vector<16x64xf32>,
    %c0_i32_8 = arith.constant 0 : i32
    %9 = arith.cmpi eq, %arg2, %c0_i32_8 : i32
    %10 = arith.extui %9 : i1 to i32
    %c0_i32_9 = arith.constant 0 : i32
    %11 = arith.cmpi ne, %10, %c0_i32_9 : i32
    scf.if %11 {
      %c0_10 = arith.constant 0 : index
      %c0_11 = arith.constant 0 : index
      %12 = vector.load %arg6[%c0_10, %c0_11] : memref<16x64xf32, #tpu.memory_space<vmem>>, vector<16x64xf32>
      %c0_12 = arith.constant 0 : index
      %c0_13 = arith.constant 0 : index
      %13 = vector.load %arg5[%c0_12, %c0_13] : memref<16x64xf32, #tpu.memory_space<vmem>>, vector<16x64xf32>
      tpu.vector_store %arg5[%c0_12, %c0_13], %12 {strides = array<i32>} : memref<16x64xf32, #tpu.memory_space<vmem>>, vector<16x64xf32>,
    } else {
    }
    return
  }
  func.func @transform_0(%arg0: i32, %arg1: i32, %arg2: i32) -> (i32, i32) {
    %c0_i32 = arith.constant 0 : i32
    return %arg0, %arg2 : i32, i32
  }
  func.func @transform_1(%arg0: i32, %arg1: i32, %arg2: i32) -> (i32, i32) {
    %c0_i32 = arith.constant 0 : i32
    return %arg2, %arg1 : i32, i32
  }
  func.func @transform_2(%arg0: i32, %arg1: i32, %arg2: i32) -> (i32, i32) {
    %c0_i32 = arith.constant 0 : i32
    return %arg0, %arg1 : i32, i32
  }
}

</mosaic_0001>

<llo_original>
// kernel: decoder_model_forward.10
$region0: #{decoder_model_forward.10}
  #allocation0 [shape = 'u32[]', space=smem, size = 0x4, offset = 0x4, fixed_abs, tag = 'smem constant byte address 0x4 - core index']
  #allocation1 [shape = 'u32[72,128]{1,0:T(1,128)}', space=vmem, size = 0x9000, scoped, tag = 'internal scratch']
  #allocation2 [shape = 'f32[16,96]{1,0:T(8,128)}', space=vmem, size = 0x2000, scoped, tag = 'scratch operand']
  %s0 = inlined_call_operand.vmem [shape: f32[16,32], index: 0, kind: input, shape index: {}]
  %s1 = inlined_call_operand.vmem [shape: f32[32,96], index: 1, kind: input, shape index: {}]
  %s2 = inlined_call_operand.vmem [shape: f32[1,96], index: 2, kind: input, shape index: {}]
  %s3 = inlined_call_operand.vmem [shape: f32[16,96], index: 3, kind: output, shape index: {}]
  %s4 = sld [smem:[#allocation0]]
  $region30: #{decoder_model_forward.10} parent=0
    _
  %s6 = ssub.s32 1, %s4
  %s7 = scalar_select 0, %s6, %s4
  // Predicated region
  $region2: #{decoder_model_forward.10} parent=0 // pred_check
    _
  $region3: #{decoder_model_forward.10} parent=0 // pred_check_branch
    %9 = sbr.rel (0) target = $region5
  $region4: #{decoder_model_forward.10} parent=0 // pred_region
    _
  $region5: #{decoder_model_forward.10} parent=0 // pred_fallthru
    _
  // Predicated region
  $region6: #{decoder_model_forward.10} parent=0 // pred_check
    _
  $region7: #{decoder_model_forward.10} parent=0 // pred_check_branch
    %11 = sbr.rel (0) target = $region9
  $region8: #{decoder_model_forward.10} parent=0 // pred_region
    _
  $region9: #{decoder_model_forward.10} parent=0 // pred_fallthru
    _
  // Predicated region
  $region10: #{decoder_model_forward.10} parent=0 // pred_check
    _
  $region11: #{decoder_model_forward.10} parent=0 // pred_check_branch
    %13 = sbr.rel (0) target = $region13
  $region12: #{decoder_model_forward.10} parent=0 // pred_region
    _
  $region13: #{decoder_model_forward.10} parent=0 // pred_fallthru
    _
  %p14 = scmp.eq.s32.totalorder 0, 0
  // Predicated region
  $region14: #{decoder_model_forward.10} parent=0 // pred_check
    %p15 = pneg %p14
  $region15: #{decoder_model_forward.10} parent=0 // pred_check_branch
    %17 = sbr.rel (%p15) target = $region17
  $region16: #{decoder_model_forward.10} parent=0 // pred_region
    %vm18 = vcmask 785408
    %19 = vst.msk [vmem:[#allocation2] sm:$0xff] %vm18, 0.0
    %20 = vst.msk [vmem:[#allocation2 + $0x8] sm:$0xff] %vm18, 0.0
  $region17: #{decoder_model_forward.10} parent=0 // pred_fallthru
    _
  %v21 = vld [vmem:[#allocation2] sm:$0xff]
  %v22 = vld [vmem:[#allocation2 + $0x8] sm:$0xff]
  %v23 = vld [vmem:[%s0] sm:$0xff]
  %v24 = vld [vmem:[%s0 + $0x8] sm:$0xff]
  %v25 = vld [vmem:[%s1] sm:$0xff]
  %v26 = vld [vmem:[%s1 + $0x8] sm:$0xff]
  %v27 = vld [vmem:[%s1 + $0x10] sm:$0xff]
  %v28 = vld [vmem:[%s1 + $0x18] sm:$0xff]
  %vm29 = vcmask 261120
  %v31 = vsel %vm29, %v23, 0
  %v34 = vsel %vm29, %v24, 0
  %36 = vmatpush.msra.mxu0 0.0
  %37 = vmatpush.msra.mxu0 0.0
  %38 = vmatpush.msra.mxu0 0.0
  %39 = vmatpush.msra.mxu0 0.0
  %40 = vmatpush.msra.mxu0 0.0
  %41 = vmatpush.msra.mxu0 0.0
  %42 = vmatpush.msra.mxu0 0.0
  %43 = vmatpush.msra.mxu0 0.0
  %44 = vmatpush.msra.mxu0 0.0
  %45 = vmatpush.msra.mxu0 0.0
  %46 = vmatpush.msra.mxu0 0.0
  %47 = vmatpush.msra.mxu0 0.0
  %48 = vmatpush.msra.mxu0 %v28
  %49 = vmatpush.msra.mxu0 %v27
  %50 = vmatpush.msra.mxu0 %v26
  %51 = vmatpush.msra.mxu0 %v25
  %52 = vmatmul.f32.gmra.mxu0 %v31
  %v53 = vpop.f32.mrf.mxu0
  %v54 = vadd.f32 0.0, %v53
  %55 = vmatmul.f32.gmra.mxu0 %v34
  %v56 = vpop.f32.mrf.mxu0
  %v57 = vadd.f32 0.0, %v56
  %58 = vdwg.mxu0
  %v59 = vadd.f32 %v21, %v54
  %v60 = vadd.f32 %v22, %v57
  %vm61 = vcmask 785408
  %62 = vst.msk [vmem:[#allocation2] sm:$0xff] %vm61, %v59
  %63 = vst.msk [vmem:[#allocation2 + $0x8] sm:$0xff] %vm61, %v60
  // Predicated region
  $region18: #{decoder_model_forward.10} parent=0 // pred_check
    %p64 = pneg %p14
  $region19: #{decoder_model_forward.10} parent=0 // pred_check_branch
    %66 = sbr.rel (%p64) target = $region21
  $region20: #{decoder_model_forward.10} parent=0 // pred_region
    %v67 = vld [vmem:[#allocation2] sm:$0xff]
    %v68 = vld [vmem:[#allocation2 + $0x8] sm:$0xff]
    %v69 = vld [vmem:[%s2] sm:$0x1]
    %v71 = vperm.slane %v69, 0
    %v73 = vadd.f32 %v67, %v71
    %v74 = vadd.f32 %v68, %v71
    %75 = vst.msk [vmem:[%s3] sm:$0xff] %vm61, %v73
    %76 = vst.msk [vmem:[%s3 + $0x8] sm:$0xff] %vm61, %v74
  $region21: #{decoder_model_forward.10} parent=0 // pred_fallthru
    _
  // Predicated region
  $region22: #{decoder_model_forward.10} parent=0 // pred_check
    _
  $region23: #{decoder_model_forward.10} parent=0 // pred_check_branch
    %78 = sbr.rel (0) target = $region25
  $region24: #{decoder_model_forward.10} parent=0 // pred_region
    _
  $region25: #{decoder_model_forward.10} parent=0 // pred_fallthru
    _
  // Predicated region
  $region26: #{decoder_model_forward.10} parent=0 // pred_check
    _
  $region27: #{decoder_model_forward.10} parent=0 // pred_check_branch
    %80 = sbr.rel (0) target = $region29
  $region28: #{decoder_model_forward.10} parent=0 // pred_region
    _
  $region29: #{decoder_model_forward.10} parent=0 // pred_fallthru
    _

// kernel: decoder_model_forward.13
$region0: #{decoder_model_forward.13}
  #allocation0 [shape = 'u32[]', space=smem, size = 0x4, offset = 0x4, fixed_abs, tag = 'smem constant byte address 0x4 - core index']
  #allocation1 [shape = 'u32[72,128]{1,0:T(1,128)}', space=vmem, size = 0x9000, scoped, tag = 'internal scratch']
  %s0 = inlined_call_operand.vmem [shape: f32[16,32], index: 0, kind: input, shape index: {}]
  %s1 = inlined_call_operand.vmem [shape: f32[32,64], index: 1, kind: input, shape index: {}]
  %s2 = inlined_call_operand.vmem [shape: f32[1,64], index: 2, kind: input, shape index: {}]
  %s3 = inlined_call_operand.vmem [shape: f32[64,32], index: 3, kind: input, shape index: {}]
  %s4 = inlined_call_operand.vmem [shape: f32[1,32], index: 4, kind: input, shape index: {}]
  %s5 = inlined_call_operand.vmem [shape: f32[1,32], index: 5, kind: input, shape index: {}]
  %s6 = inlined_call_operand.vmem [shape: f32[1,32], index: 6, kind: input, shape index: {}]
  %s7 = inlined_call_operand.vmem [shape: f32[16,32], index: 7, kind: output, shape index: {}]
  %s8 = sld [smem:[#allocation0]]
  $region38: #{decoder_model_forward.13} parent=0
    _
  %s10 = ssub.s32 1, %s8
  %s11 = scalar_select 0, %s10, %s8
  // Predicated region
  $region2: #{decoder_model_forward.13} parent=0 // pred_check
    _
  $region3: #{decoder_model_forward.13} parent=0 // pred_check_branch
    %13 = sbr.rel (0) target = $region5
  $region4: #{decoder_model_forward.13} parent=0 // pred_region
    _
  $region5: #{decoder_model_forward.13} parent=0 // pred_fallthru
    _
  // Predicated region
  $region6: #{decoder_model_forward.13} parent=0 // pred_check
    _
  $region7: #{decoder_model_forward.13} parent=0 // pred_check_branch
    %15 = sbr.rel (0) target = $region9
  $region8: #{decoder_model_forward.13} parent=0 // pred_region
    _
  $region9: #{decoder_model_forward.13} parent=0 // pred_fallthru
    _
  // Predicated region
  $region10: #{decoder_model_forward.13} parent=0 // pred_check
    _
  $region11: #{decoder_model_forward.13} parent=0 // pred_check_branch
    %17 = sbr.rel (0) target = $region13
  $region12: #{decoder_model_forward.13} parent=0 // pred_region
    _
  $region13: #{decoder_model_forward.13} parent=0 // pred_fallthru
    _
  // Predicated region
  $region14: #{decoder_model_forward.13} parent=0 // pred_check
    _
  $region15: #{decoder_model_forward.13} parent=0 // pred_check_branch
    %19 = sbr.rel (0) target = $region17
  $region16: #{decoder_model_forward.13} parent=0 // pred_region
    _
  $region17: #{decoder_model_forward.13} parent=0 // pred_fallthru
    _
  // Predicated region
  $region18: #{decoder_model_forward.13} parent=0 // pred_check
    _
  $region19: #{decoder_model_forward.13} parent=0 // pred_check_branch
    %21 = sbr.rel (0) target = $region21
  $region20: #{decoder_model_forward.13} parent=0 // pred_region
    _
  $region21: #{decoder_model_forward.13} parent=0 // pred_fallthru
    _
  // Predicated region
  $region22: #{decoder_model_forward.13} parent=0 // pred_check
    _
  $region23: #{decoder_model_forward.13} parent=0 // pred_check_branch
    %23 = sbr.rel (0) target = $region25
  $region24: #{decoder_model_forward.13} parent=0 // pred_region
    _
  $region25: #{decoder_model_forward.13} parent=0 // pred_fallthru
    _
  // Predicated region
  $region26: #{decoder_model_forward.13} parent=0 // pred_check
    _
  $region27: #{decoder_model_forward.13} parent=0 // pred_check_branch
    %25 = sbr.rel (0) target = $region29
  $region28: #{decoder_model_forward.13} parent=0 // pred_region
    _
  $region29: #{decoder_model_forward.13} parent=0 // pred_fallthru
    _
  %v26 = vld [vmem:[%s0] sm:$0xff]
  %v27 = vld [vmem:[%s0 + $0x8] sm:$0xff]
  %v28 = vld [vmem:[%s1] sm:$0xff]
  %v29 = vld [vmem:[%s1 + $0x8] sm:$0xff]
  %v30 = vld [vmem:[%s1 + $0x10] sm:$0xff]
  %v31 = vld [vmem:[%s1 + $0x18] sm:$0xff]
  %v32 = vld [vmem:[%s2] sm:$0x1]
  %v34 = vperm.slane %v32, 0
  %vm36 = vcmask 261120
  %v38 = vsel %vm36, %v26, 0
  %v41 = vsel %vm36, %v27, 0
  %43 = vmatpush.msra.mxu0 0.0
  %44 = vmatpush.msra.mxu0 0.0
  %45 = vmatpush.msra.mxu0 0.0
  %46 = vmatpush.msra.mxu0 0.0
  %47 = vmatpush.msra.mxu0 0.0
  %48 = vmatpush.msra.mxu0 0.0
  %49 = vmatpush.msra.mxu0 0.0
  %50 = vmatpush.msra.mxu0 0.0
  %51 = vmatpush.msra.mxu0 0.0
  %52 = vmatpush.msra.mxu0 0.0
  %53 = vmatpush.msra.mxu0 0.0
  %54 = vmatpush.msra.mxu0 0.0
  %55 = vmatpush.msra.mxu0 %v31
  %56 = vmatpush.msra.mxu0 %v30
  %57 = vmatpush.msra.mxu0 %v29
  %58 = vmatpush.msra.mxu0 %v28
  %59 = vmatmul.f32.gmra.mxu0 %v38
  %v60 = vpop.f32.mrf.mxu0
  %v61 = vadd.f32 %v34, %v60
  %62 = vmatmul.f32.gmra.mxu0 %v41
  %v63 = vpop.f32.mrf.mxu0
  %v64 = vadd.f32 %v34, %v63
  %65 = vdwg.mxu0
  %v66 = vmax.f32 %v61, 0.0
  %v67 = vmax.f32 %v64, 0.0
  %v68 = vld [vmem:[%s3] sm:$0xff]
  %v69 = vld [vmem:[%s3 + $0x8] sm:$0xff]
  %v70 = vld [vmem:[%s3 + $0x10] sm:$0xff]
  %v71 = vld [vmem:[%s3 + $0x18] sm:$0xff]
  %v72 = vld [vmem:[%s3 + $0x20] sm:$0xff]
  %v73 = vld [vmem:[%s3 + $0x28] sm:$0xff]
  %v74 = vld [vmem:[%s3 + $0x30] sm:$0xff]
  %v75 = vld [vmem:[%s3 + $0x38] sm:$0xff]
  %v76 = vld [vmem:[%s4] sm:$0x1]
  %v78 = vperm.slane %v76, 0
  %vm80 = vcmask 523264
  %v82 = vsel %vm80, %v66, 0
  %v85 = vsel %vm80, %v67, 0
  %87 = vmatpush.msra.mxu0 0.0
  %88 = vmatpush.msra.mxu0 0.0
  %89 = vmatpush.msra.mxu0 0.0
  %90 = vmatpush.msra.mxu0 0.0
  %91 = vmatpush.msra.mxu0 0.0
  %92 = vmatpush.msra.mxu0 0.0
  %93 = vmatpush.msra.mxu0 0.0
  %94 = vmatpush.msra.mxu0 0.0
  %95 = vmatpush.msra.mxu0 %v75
  %96 = vmatpush.msra.mxu0 %v74
  %97 = vmatpush.msra.mxu0 %v73
  %98 = vmatpush.msra.mxu0 %v72
  %99 = vmatpush.msra.mxu0 %v71
  %100 = vmatpush.msra.mxu0 %v70
  %101 = vmatpush.msra.mxu0 %v69
  %102 = vmatpush.msra.mxu0 %v68
  %103 = vmatmul.f32.gmra.mxu0 %v82
  %v104 = vpop.f32.mrf.mxu0
  %v105 = vadd.f32 %v78, %v104
  %106 = vmatmul.f32.gmra.mxu0 %v85
  %v107 = vpop.f32.mrf.mxu0
  %v108 = vadd.f32 %v78, %v107
  %109 = vdwg.mxu0
  %v110 = vadd.f32 %v26, %v105
  %v111 = vadd.f32 %v27, %v108
  %v112 = vld [vmem:[%s5] sm:$0x1]
  %v113 = vld [vmem:[%s6] sm:$0x1]
  %v114 = vsel %vm36, %v110, 0.0
  %115 = vadd.xlane.f32.xlu0 %v114
  %v116 = vpop.xlane.xlu0 %115
  %v117 = vsel %vm36, %v111, 0.0
  %118 = vadd.xlane.f32.xlu0 %v117
  %v119 = vpop.xlane.xlu0 %118
  %v120 = vrcp.pop 32.0
  %v121 = vmul.f32 32.0, %v120
  %v122 = vsub.f32 1.0, %v121
  %v123 = vmul.f32 %v120, %v122
  %v124 = vadd.f32 %v120, %v123
  %vm125 = vweird.f32 %v120
  %v126 = vsel %vm125, %v120, %v124
  %v127 = vmul.f32 %v116, %v126
  %v128 = vmul.f32 %v119, %v126
  %v129 = vsub.f32 %v110, %v127
  %v130 = vsub.f32 %v111, %v128
  %v131 = vmul.f32 %v129, %v129
  %v132 = vmul.f32 %v130, %v130
  %v133 = vsel %vm36, %v131, 0.0
  %134 = vadd.xlane.f32.xlu0 %v133
  %v135 = vpop.xlane.xlu0 %134
  %v136 = vsel %vm36, %v132, 0.0
  %137 = vadd.xlane.f32.xlu0 %v136
  %v138 = vpop.xlane.xlu0 %137
  %v139 = vmul.f32 %v135, %v126
  %v140 = vmul.f32 %v138, %v126
  %v141 = vadd.f32 %v139, 1e-05
  %v142 = vadd.f32 %v140, 1e-05
  %v143 = vrsqrt.pop %v141
  %v144 = vmul.f32 %v143, %v141
  %v145 = vmul.f32 %v144, %v143
  %v146 = vmul.f32 0.5, %v145
  %v147 = vsub.f32 1.5, %v146
  %v148 = vmul.f32 %v143, %v147
  %vm149 = vweird.f32 %v141
  %vm150 = vweird.f32 %v143
  %vm151 = vmor %vm149, %vm150
  %v152 = vsel %vm151, %v143, %v148
  %v153 = vrsqrt.pop %v142
  %v154 = vmul.f32 %v153, %v142
  %v155 = vmul.f32 %v154, %v153
  %v156 = vmul.f32 0.5, %v155
  %v157 = vsub.f32 1.5, %v156
  %v158 = vmul.f32 %v153, %v157
  %vm159 = vweird.f32 %v142
  %vm160 = vweird.f32 %v153
  %vm161 = vmor %vm159, %vm160
  %v162 = vsel %vm161, %v153, %v158
  %v163 = vmul.f32 %v129, %v152
  %v164 = vmul.f32 %v130, %v162
  %v166 = vperm.slane %v112, 0
  %v168 = vmul.f32 %v163, %v166
  %v169 = vmul.f32 %v164, %v166
  %v171 = vperm.slane %v113, 0
  %v173 = vadd.f32 %v168, %v171
  %v174 = vadd.f32 %v169, %v171
  %175 = vst.msk [vmem:[%s7] sm:$0xff] %vm36, %v173
  %176 = vst.msk [vmem:[%s7 + $0x8] sm:$0xff] %vm36, %v174
  // Predicated region
  $region30: #{decoder_model_forward.13} parent=0 // pred_check
    _
  $region31: #{decoder_model_forward.13} parent=0 // pred_check_branch
    %178 = sbr.rel (0) target = $region33
  $region32: #{decoder_model_forward.13} parent=0 // pred_region
    _
  $region33: #{decoder_model_forward.13} parent=0 // pred_fallthru
    _
  // Predicated region
  $region34: #{decoder_model_forward.13} parent=0 // pred_check
    _
  $region35: #{decoder_model_forward.13} parent=0 // pred_check_branch
    %180 = sbr.rel (0) target = $region37
  $region36: #{decoder_model_forward.13} parent=0 // pred_region
    _
  $region37: #{decoder_model_forward.13} parent=0 // pred_fallthru
    _

// kernel: decoder_model_forward.12
$region0: #{decoder_model_forward.12}
  #allocation0 [shape = 'u32[]', space=smem, size = 0x4, offset = 0x4, fixed_abs, tag = 'smem constant byte address 0x4 - core index']
  #allocation1 [shape = 'u32[72,128]{1,0:T(1,128)}', space=vmem, size = 0x9000, scoped, tag = 'internal scratch']
  %s0 = inlined_call_operand.vmem [shape: f32[16,32], index: 0, kind: input, shape index: {}]
  %s1 = inlined_call_operand.vmem [shape: f32[32,32], index: 1, kind: input, shape index: {}]
  %s2 = inlined_call_operand.vmem [shape: f32[1,32], index: 2, kind: input, shape index: {}]
  %s3 = inlined_call_operand.vmem [shape: f32[16,32], index: 3, kind: input, shape index: {}]
  %s4 = inlined_call_operand.vmem [shape: f32[1,32], index: 4, kind: input, shape index: {}]
  %s5 = inlined_call_operand.vmem [shape: f32[1,32], index: 5, kind: input, shape index: {}]
  %s6 = inlined_call_operand.vmem [shape: f32[16,32], index: 6, kind: output, shape index: {}]
  %s7 = sld [smem:[#allocation0]]
  $region34: #{decoder_model_forward.12} parent=0
    _
  %s9 = ssub.s32 1, %s7
  %s10 = scalar_select 0, %s9, %s7
  // Predicated region
  $region2: #{decoder_model_forward.12} parent=0 // pred_check
    _
  $region3: #{decoder_model_forward.12} parent=0 // pred_check_branch
    %12 = sbr.rel (0) target = $region5
  $region4: #{decoder_model_forward.12} parent=0 // pred_region
    _
  $region5: #{decoder_model_forward.12} parent=0 // pred_fallthru
    _
  // Predicated region
  $region6: #{decoder_model_forward.12} parent=0 // pred_check
    _
  $region7: #{decoder_model_forward.12} parent=0 // pred_check_branch
    %14 = sbr.rel (0) target = $region9
  $region8: #{decoder_model_forward.12} parent=0 // pred_region
    _
  $region9: #{decoder_model_forward.12} parent=0 // pred_fallthru
    _
  // Predicated region
  $region10: #{decoder_model_forward.12} parent=0 // pred_check
    _
  $region11: #{decoder_model_forward.12} parent=0 // pred_check_branch
    %16 = sbr.rel (0) target = $region13
  $region12: #{decoder_model_forward.12} parent=0 // pred_region
    _
  $region13: #{decoder_model_forward.12} parent=0 // pred_fallthru
    _
  // Predicated region
  $region14: #{decoder_model_forward.12} parent=0 // pred_check
    _
  $region15: #{decoder_model_forward.12} parent=0 // pred_check_branch
    %18 = sbr.rel (0) target = $region17
  $region16: #{decoder_model_forward.12} parent=0 // pred_region
    _
  $region17: #{decoder_model_forward.12} parent=0 // pred_fallthru
    _
  // Predicated region
  $region18: #{decoder_model_forward.12} parent=0 // pred_check
    _
  $region19: #{decoder_model_forward.12} parent=0 // pred_check_branch
    %20 = sbr.rel (0) target = $region21
  $region20: #{decoder_model_forward.12} parent=0 // pred_region
    _
  $region21: #{decoder_model_forward.12} parent=0 // pred_fallthru
    _
  // Predicated region
  $region22: #{decoder_model_forward.12} parent=0 // pred_check
    _
  $region23: #{decoder_model_forward.12} parent=0 // pred_check_branch
    %22 = sbr.rel (0) target = $region25
  $region24: #{decoder_model_forward.12} parent=0 // pred_region
    _
  $region25: #{decoder_model_forward.12} parent=0 // pred_fallthru
    _
  %v23 = vld [vmem:[%s0] sm:$0xff]
  %v24 = vld [vmem:[%s0 + $0x8] sm:$0xff]
  %v25 = vld [vmem:[%s1] sm:$0xff]
  %v26 = vld [vmem:[%s1 + $0x8] sm:$0xff]
  %v27 = vld [vmem:[%s1 + $0x10] sm:$0xff]
  %v28 = vld [vmem:[%s1 + $0x18] sm:$0xff]
  %v29 = vld [vmem:[%s2] sm:$0x1]
  %v31 = vperm.slane %v29, 0
  %vm33 = vcmask 261120
  %v35 = vsel %vm33, %v23, 0
  %v38 = vsel %vm33, %v24, 0
  %40 = vmatpush.msra.mxu0 0.0
  %41 = vmatpush.msra.mxu0 0.0
  %42 = vmatpush.msra.mxu0 0.0
  %43 = vmatpush.msra.mxu0 0.0
  %44 = vmatpush.msra.mxu0 0.0
  %45 = vmatpush.msra.mxu0 0.0
  %46 = vmatpush.msra.mxu0 0.0
  %47 = vmatpush.msra.mxu0 0.0
  %48 = vmatpush.msra.mxu0 0.0
  %49 = vmatpush.msra.mxu0 0.0
  %50 = vmatpush.msra.mxu0 0.0
  %51 = vmatpush.msra.mxu0 0.0
  %52 = vmatpush.msra.mxu0 %v28
  %53 = vmatpush.msra.mxu0 %v27
  %54 = vmatpush.msra.mxu0 %v26
  %55 = vmatpush.msra.mxu0 %v25
  %56 = vmatmul.f32.gmra.mxu0 %v35
  %v57 = vpop.f32.mrf.mxu0
  %v58 = vadd.f32 %v31, %v57
  %59 = vmatmul.f32.gmra.mxu0 %v38
  %v60 = vpop.f32.mrf.mxu0
  %v61 = vadd.f32 %v31, %v60
  %62 = vdwg.mxu0
  %v63 = vld [vmem:[%s3] sm:$0xff]
  %v64 = vld [vmem:[%s3 + $0x8] sm:$0xff]
  %v65 = vadd.f32 %v63, %v58
  %v66 = vadd.f32 %v64, %v61
  %v67 = vld [vmem:[%s4] sm:$0x1]
  %v68 = vld [vmem:[%s5] sm:$0x1]
  %v69 = vsel %vm33, %v65, 0.0
  %70 = vadd.xlane.f32.xlu0 %v69
  %v71 = vpop.xlane.xlu0 %70
  %v72 = vsel %vm33, %v66, 0.0
  %73 = vadd.xlane.f32.xlu0 %v72
  %v74 = vpop.xlane.xlu0 %73
  %v75 = vrcp.pop 32.0
  %v76 = vmul.f32 32.0, %v75
  %v77 = vsub.f32 1.0, %v76
  %v78 = vmul.f32 %v75, %v77
  %v79 = vadd.f32 %v75, %v78
  %vm80 = vweird.f32 %v75
  %v81 = vsel %vm80, %v75, %v79
  %v82 = vmul.f32 %v71, %v81
  %v83 = vmul.f32 %v74, %v81
  %v84 = vsub.f32 %v65, %v82
  %v85 = vsub.f32 %v66, %v83
  %v86 = vmul.f32 %v84, %v84
  %v87 = vmul.f32 %v85, %v85
  %v88 = vsel %vm33, %v86, 0.0
  %89 = vadd.xlane.f32.xlu0 %v88
  %v90 = vpop.xlane.xlu0 %89
  %v91 = vsel %vm33, %v87, 0.0
  %92 = vadd.xlane.f32.xlu0 %v91
  %v93 = vpop.xlane.xlu0 %92
  %v94 = vmul.f32 %v90, %v81
  %v95 = vmul.f32 %v93, %v81
  %v96 = vadd.f32 %v94, 1e-05
  %v97 = vadd.f32 %v95, 1e-05
  %v98 = vrsqrt.pop %v96
  %v99 = vmul.f32 %v98, %v96
  %v100 = vmul.f32 %v99, %v98
  %v101 = vmul.f32 0.5, %v100
  %v102 = vsub.f32 1.5, %v101
  %v103 = vmul.f32 %v98, %v102
  %vm104 = vweird.f32 %v96
  %vm105 = vweird.f32 %v98
  %vm106 = vmor %vm104, %vm105
  %v107 = vsel %vm106, %v98, %v103
  %v108 = vrsqrt.pop %v97
  %v109 = vmul.f32 %v108, %v97
  %v110 = vmul.f32 %v109, %v108
  %v111 = vmul.f32 0.5, %v110
  %v112 = vsub.f32 1.5, %v111
  %v113 = vmul.f32 %v108, %v112
  %vm114 = vweird.f32 %v97
  %vm115 = vweird.f32 %v108
  %vm116 = vmor %vm114, %vm115
  %v117 = vsel %vm116, %v108, %v113
  %v118 = vmul.f32 %v84, %v107
  %v119 = vmul.f32 %v85, %v117
  %v121 = vperm.slane %v67, 0
  %v123 = vmul.f32 %v118, %v121
  %v124 = vmul.f32 %v119, %v121
  %v126 = vperm.slane %v68, 0
  %v128 = vadd.f32 %v123, %v126
  %v129 = vadd.f32 %v124, %v126
  %130 = vst.msk [vmem:[%s6] sm:$0xff] %vm33, %v128
  %131 = vst.msk [vmem:[%s6 + $0x8] sm:$0xff] %vm33, %v129
  // Predicated region
  $region26: #{decoder_model_forward.12} parent=0 // pred_check
    _
  $region27: #{decoder_model_forward.12} parent=0 // pred_check_branch
    %133 = sbr.rel (0) target = $region29
  $region28: #{decoder_model_forward.12} parent=0 // pred_region
    _
  $region29: #{decoder_model_forward.12} parent=0 // pred_fallthru
    _
  // Predicated region
  $region30: #{decoder_model_forward.12} parent=0 // pred_check
    _
  $region31: #{decoder_model_forward.12} parent=0 // pred_check_branch
    %135 = sbr.rel (0) target = $region33
  $region32: #{decoder_model_forward.12} parent=0 // pred_region
    _
  $region33: #{decoder_model_forward.12} parent=0 // pred_fallthru
    _

// kernel: decoder_model_forward.18
$region0: #{decoder_model_forward.18}
  #allocation0 [shape = 'u32[]', space=smem, size = 0x4, offset = 0x4, fixed_abs, tag = 'smem constant byte address 0x4 - core index']
  #allocation1 [shape = 'u32[72,128]{1,0:T(1,128)}', space=vmem, size = 0x9000, scoped, tag = 'internal scratch']
  %s0 = inlined_call_operand.vmem [shape: f32[16,32], index: 0, kind: input, shape index: {}]
  %s1 = inlined_call_operand.vmem [shape: f32[1,32], index: 1, kind: input, shape index: {}]
  %s2 = inlined_call_operand.vmem [shape: f32[1,32], index: 2, kind: input, shape index: {}]
  %s3 = inlined_call_operand.vmem [shape: f32[16,32], index: 3, kind: output, shape index: {}]
  %s4 = sld [smem:[#allocation0]]
  $region22: #{decoder_model_forward.18} parent=0
    _
  %s6 = ssub.s32 1, %s4
  %s7 = scalar_select 0, %s6, %s4
  // Predicated region
  $region2: #{decoder_model_forward.18} parent=0 // pred_check
    _
  $region3: #{decoder_model_forward.18} parent=0 // pred_check_branch
    %9 = sbr.rel (0) target = $region5
  $region4: #{decoder_model_forward.18} parent=0 // pred_region
    _
  $region5: #{decoder_model_forward.18} parent=0 // pred_fallthru
    _
  // Predicated region
  $region6: #{decoder_model_forward.18} parent=0 // pred_check
    _
  $region7: #{decoder_model_forward.18} parent=0 // pred_check_branch
    %11 = sbr.rel (0) target = $region9
  $region8: #{decoder_model_forward.18} parent=0 // pred_region
    _
  $region9: #{decoder_model_forward.18} parent=0 // pred_fallthru
    _
  // Predicated region
  $region10: #{decoder_model_forward.18} parent=0 // pred_check
    _
  $region11: #{decoder_model_forward.18} parent=0 // pred_check_branch
    %13 = sbr.rel (0) target = $region13
  $region12: #{decoder_model_forward.18} parent=0 // pred_region
    _
  $region13: #{decoder_model_forward.18} parent=0 // pred_fallthru
    _
  %v14 = vld [vmem:[%s0] sm:$0xff]
  %v15 = vld [vmem:[%s0 + $0x8] sm:$0xff]
  %v16 = vld [vmem:[%s1] sm:$0x1]
  %v17 = vld [vmem:[%s2] sm:$0x1]
  %vm18 = vcmask 261120
  %v19 = vsel %vm18, %v14, 0.0
  %20 = vadd.xlane.f32.xlu0 %v19
  %v21 = vpop.xlane.xlu0 %20
  %v22 = vsel %vm18, %v15, 0.0
  %23 = vadd.xlane.f32.xlu0 %v22
  %v24 = vpop.xlane.xlu0 %23
  %v25 = vrcp.pop 32.0
  %v26 = vmul.f32 32.0, %v25
  %v27 = vsub.f32 1.0, %v26
  %v28 = vmul.f32 %v25, %v27
  %v29 = vadd.f32 %v25, %v28
  %vm30 = vweird.f32 %v25
  %v31 = vsel %vm30, %v25, %v29
  %v32 = vmul.f32 %v21, %v31
  %v33 = vmul.f32 %v24, %v31
  %v34 = vsub.f32 %v14, %v32
  %v35 = vsub.f32 %v15, %v33
  %v36 = vmul.f32 %v34, %v34
  %v37 = vmul.f32 %v35, %v35
  %v38 = vsel %vm18, %v36, 0.0
  %39 = vadd.xlane.f32.xlu0 %v38
  %v40 = vpop.xlane.xlu0 %39
  %v41 = vsel %vm18, %v37, 0.0
  %42 = vadd.xlane.f32.xlu0 %v41
  %v43 = vpop.xlane.xlu0 %42
  %v44 = vmul.f32 %v40, %v31
  %v45 = vmul.f32 %v43, %v31
  %v46 = vadd.f32 %v44, 1e-05
  %v47 = vadd.f32 %v45, 1e-05
  %v48 = vrsqrt.pop %v46
  %v49 = vmul.f32 %v48, %v46
  %v50 = vmul.f32 %v49, %v48
  %v51 = vmul.f32 0.5, %v50
  %v52 = vsub.f32 1.5, %v51
  %v53 = vmul.f32 %v48, %v52
  %vm54 = vweird.f32 %v46
  %vm55 = vweird.f32 %v48
  %vm56 = vmor %vm54, %vm55
  %v57 = vsel %vm56, %v48, %v53
  %v58 = vrsqrt.pop %v47
  %v59 = vmul.f32 %v58, %v47
  %v60 = vmul.f32 %v59, %v58
  %v61 = vmul.f32 0.5, %v60
  %v62 = vsub.f32 1.5, %v61
  %v63 = vmul.f32 %v58, %v62
  %vm64 = vweird.f32 %v47
  %vm65 = vweird.f32 %v58
  %vm66 = vmor %vm64, %vm65
  %v67 = vsel %vm66, %v58, %v63
  %v68 = vmul.f32 %v34, %v57
  %v69 = vmul.f32 %v35, %v67
  %v71 = vperm.slane %v16, 0
  %v73 = vmul.f32 %v68, %v71
  %v74 = vmul.f32 %v69, %v71
  %v76 = vperm.slane %v17, 0
  %v78 = vadd.f32 %v73, %v76
  %v79 = vadd.f32 %v74, %v76
  %80 = vst.msk [vmem:[%s3] sm:$0xff] %vm18, %v78
  %81 = vst.msk [vmem:[%s3 + $0x8] sm:$0xff] %vm18, %v79
  // Predicated region
  $region14: #{decoder_model_forward.18} parent=0 // pred_check
    _
  $region15: #{decoder_model_forward.18} parent=0 // pred_check_branch
    %83 = sbr.rel (0) target = $region17
  $region16: #{decoder_model_forward.18} parent=0 // pred_region
    _
  $region17: #{decoder_model_forward.18} parent=0 // pred_fallthru
    _
  // Predicated region
  $region18: #{decoder_model_forward.18} parent=0 // pred_check
    _
  $region19: #{decoder_model_forward.18} parent=0 // pred_check_branch
    %85 = sbr.rel (0) target = $region21
  $region20: #{decoder_model_forward.18} parent=0 // pred_region
    _
  $region21: #{decoder_model_forward.18} parent=0 // pred_fallthru
    _

// kernel: decoder_model_forward.19
$region0: #{decoder_model_forward.19}
  #allocation0 [shape = 'u32[]', space=smem, size = 0x4, offset = 0x4, fixed_abs, tag = 'smem constant byte address 0x4 - core index']
  #allocation1 [shape = 'u32[72,128]{1,0:T(1,128)}', space=vmem, size = 0x9000, scoped, tag = 'internal scratch']
  #allocation2 [shape = 'f32[16,64]{1,0:T(8,128)}', space=vmem, size = 0x2000, scoped, tag = 'scratch operand']
  %s0 = inlined_call_operand.vmem [shape: f32[16,32], index: 0, kind: input, shape index: {}]
  %s1 = inlined_call_operand.vmem [shape: f32[32,64], index: 1, kind: input, shape index: {}]
  %s2 = inlined_call_operand.hbm [shape: f32[16,64], index: 2, kind: output, shape index: {}]
  %s3 = sld [smem:[#allocation0]]
  $region26: #{decoder_model_forward.19} parent=0
    _
  %s5 = ssub.s32 1, %s3
  %s6 = scalar_select 0, %s5, %s3
  $region1: #{decoder_model_forward.19} parent=0
    #allocation3 [shape = 'u8[8192]{0}', space=vmem, size = 0x2000, scoped, tag = 'output window, operand 0, single buffered']
    #allocation4 [shape = 's32[1]{0}', space=sflag, size = 0x4, scoped, tag = 'scoped memory for decoder_model_forward.19']
    %7 = vsyncpa [#allocation4], 0
    // Predicated region
    $region2: #{decoder_model_forward.19} parent=1 // pred_check
      _
    $region3: #{decoder_model_forward.19} parent=1 // pred_check_branch
      %9 = sbr.rel (0) target = $region5
    $region4: #{decoder_model_forward.19} parent=1 // pred_region
      _
    $region5: #{decoder_model_forward.19} parent=1 // pred_fallthru
      _
    // Predicated region
    $region6: #{decoder_model_forward.19} parent=1 // pred_check
      _
    $region7: #{decoder_model_forward.19} parent=1 // pred_check_branch
      %11 = sbr.rel (0) target = $region9
    $region8: #{decoder_model_forward.19} parent=1 // pred_region
      _
    $region9: #{decoder_model_forward.19} parent=1 // pred_fallthru
      _
    %p12 = scmp.eq.s32.totalorder 0, 0
    // Predicated region
    $region10: #{decoder_model_forward.19} parent=1 // pred_check
      %p13 = pneg %p12
    $region11: #{decoder_model_forward.19} parent=1 // pred_check_branch
      %15 = sbr.rel (%p13) target = $region13
    $region12: #{decoder_model_forward.19} parent=1 // pred_region
      %vm16 = vcmask 523264
      %17 = vst.msk [vmem:[#allocation2] sm:$0xff] %vm16, 0.0
      %18 = vst.msk [vmem:[#allocation2 + $0x8] sm:$0xff] %vm16, 0.0
    $region13: #{decoder_model_forward.19} parent=1 // pred_fallthru
      _
    %v19 = vld [vmem:[#allocation2] sm:$0xff]
    %v20 = vld [vmem:[#allocation2 + $0x8] sm:$0xff]
    %v21 = vld [vmem:[%s0] sm:$0xff]
    %v22 = vld [vmem:[%s0 + $0x8] sm:$0xff]
    %v23 = vld [vmem:[%s1] sm:$0xff]
    %v24 = vld [vmem:[%s1 + $0x8] sm:$0xff]
    %v25 = vld [vmem:[%s1 + $0x10] sm:$0xff]
    %v26 = vld [vmem:[%s1 + $0x18] sm:$0xff]
    %vm27 = vcmask 261120
    %v29 = vsel %vm27, %v21, 0
    %v32 = vsel %vm27, %v22, 0
    %34 = vmatpush.msra.mxu0 0.0
    %35 = vmatpush.msra.mxu0 0.0
    %36 = vmatpush.msra.mxu0 0.0
    %37 = vmatpush.msra.mxu0 0.0
    %38 = vmatpush.msra.mxu0 0.0
    %39 = vmatpush.msra.mxu0 0.0
    %40 = vmatpush.msra.mxu0 0.0
    %41 = vmatpush.msra.mxu0 0.0
    %42 = vmatpush.msra.mxu0 0.0
    %43 = vmatpush.msra.mxu0 0.0
    %44 = vmatpush.msra.mxu0 0.0
    %45 = vmatpush.msra.mxu0 0.0
    %46 = vmatpush.msra.mxu0 %v26
    %47 = vmatpush.msra.mxu0 %v25
    %48 = vmatpush.msra.mxu0 %v24
    %49 = vmatpush.msra.mxu0 %v23
    %50 = vmatmul.f32.gmra.mxu0 %v29
    %v51 = vpop.f32.mrf.mxu0
    %v52 = vadd.f32 0.0, %v51
    %53 = vmatmul.f32.gmra.mxu0 %v32
    %v54 = vpop.f32.mrf.mxu0
    %v55 = vadd.f32 0.0, %v54
    %56 = vdwg.mxu0
    %v57 = vadd.f32 %v19, %v52
    %v58 = vadd.f32 %v20, %v55
    %vm59 = vcmask 523264
    %60 = vst.msk [vmem:[#allocation2] sm:$0xff] %vm59, %v57
    %61 = vst.msk [vmem:[#allocation2 + $0x8] sm:$0xff] %vm59, %v58
    // Predicated region
    $region14: #{decoder_model_forward.19} parent=1 // pred_check
      %p62 = pneg %p12
    $region15: #{decoder_model_forward.19} parent=1 // pred_check_branch
      %64 = sbr.rel (%p62) target = $region17
    $region16: #{decoder_model_forward.19} parent=1 // pred_region
      %v65 = vld [vmem:[#allocation2] sm:$0xff]
      %v66 = vld [vmem:[#allocation2 + $0x8] sm:$0xff]
      %67 = vst.msk [vmem:[#allocation3] sm:$0xff] %vm59, %v65
      %68 = vst.msk [vmem:[#allocation3 + $0x8] sm:$0xff] %vm59, %v66
    $region17: #{decoder_model_forward.19} parent=1 // pred_fallthru
      _
    // Predicated region
    $region18: #{decoder_model_forward.19} parent=1 // pred_check
      _
    $region19: #{decoder_model_forward.19} parent=1 // pred_check_branch
      %70 = sbr.rel (0) target = $region21
    $region20: #{decoder_model_forward.19} parent=1 // pred_region
      %72 = vsyncadd [#allocation4], 0
      %s73 = sshll.u32 [#allocation3], 4
      %s74 = int_to_ptr.vmem [resolvable:$true] %s73
      %s75 = sshll.u32 %s2, 4
      %s76 = int_to_ptr.hbm [resolvable:$true] %s75
      %81 = dma.vmem_to_hbm [thread:$0]  %s74, 256, %s76, [#allocation4], 128, 128, 8
    $region21: #{decoder_model_forward.19} parent=1 // pred_fallthru
      _
    // Predicated region
    $region22: #{decoder_model_forward.19} parent=1 // pred_check
      _
    $region23: #{decoder_model_forward.19} parent=1 // pred_check_branch
      %83 = sbr.rel (0) target = $region25
    $region24: #{decoder_model_forward.19} parent=1 // pred_region
      %85 = dma.done [#allocation4], 256
    $region25: #{decoder_model_forward.19} parent=1 // pred_fallthru
      _
    %86 = vsyncpa [#allocation4], 1

// kernel: decoder_model_forward.11
$region0: #{decoder_model_forward.11}
  #allocation0 [shape = 'u32[]', space=smem, size = 0x4, offset = 0x4, fixed_abs, tag = 'smem constant byte address 0x4 - core index']
  #allocation1 [shape = 'u32[72,128]{1,0:T(1,128)}', space=vmem, size = 0x9000, scoped, tag = 'internal scratch']
  #allocation2 [shape = 'f32[4,8,1]{2,1,0:T(8,128)}', space=vmem, size = 0x4000, scoped, tag = 'scratch operand']
  #allocation3 [shape = 'f32[4,8,1]{2,1,0:T(8,128)}', space=vmem, size = 0x4000, scoped, tag = 'scratch operand']
  #allocation4 [shape = 'f32[4,8,8]{2,1,0:T(8,128)}', space=vmem, size = 0x4000, scoped, tag = 'scratch operand']
  %s0 = inlined_call_operand.vmem [shape: f32[2,8,32], index: 0, kind: input, shape index: {}]
  %s1 = inlined_call_operand.vmem [shape: f32[2,8,32], index: 1, kind: input, shape index: {}]
  %s2 = inlined_call_operand.vmem [shape: f32[2,8,32], index: 2, kind: input, shape index: {}]
  %s3 = inlined_call_operand.vmem [shape: f32[2,1,8], index: 3, kind: input, shape index: {}]
  %s4 = inlined_call_operand.vmem [shape: f32[2,8,32], index: 4, kind: output, shape index: {}]
  %s5 = sld [smem:[#allocation0]]
  $region61: #{decoder_model_forward.11} parent=0
    _
  %s7 = ssub.s32 1, %s5
  %s8 = scalar_select 0, %s7, %s5
  loop: start=0, step=1, limit=4
  $region2: #{decoder_model_forward.11} parent=0 // loop_pre_header
    _
  $region3: #{decoder_model_forward.11} parent=0 // loop_header
    %s10 = sphi 0, %s14
    %p11 = scmp.ge.s32.totalorder %s10, 4
    %s17 = sphi 0, %s36
    %s18 = sphi 0, %s32
    %s19 = sphi 0, %s28
    %s20 = sphi 0, %s17
    %s21 = sphi 0, %s18
    %s22 = sphi 0, %s19
    %s23 = sphi 0, %s20
    %s24 = sphi 0, %s21
    %s25 = sphi 0, %s22
    %s41 = sphi 0, %s43
    %s44 = sphi 0, %s41
    %s45 = sphi 0, %s44
    %s61 = sphi 0, %s45
    %s69 = sphi 0, %s71
    %s72 = sphi 0, %s69
    %s73 = sphi 0, %s72
    %s89 = sphi 0, %s73
    %s97 = sphi 0, %s99
    %s100 = sphi 0, %s97
    %s101 = sphi 0, %s100
    %s117 = sphi 0, %s101
    %s125 = sphi 0, %s127
    %s128 = sphi 0, %s125
    %s129 = sphi 0, %s128
    %s145 = sphi 0, %s129
    %s153 = sphi 0, %s155
    %s156 = sphi 0, %s153
    %s157 = sphi 0, %s156
    %s173 = sphi 0, %s157
  $region4: #{decoder_model_forward.11} parent=0 // loop_header_branch
    %13 = sbr.rel (%p11) target = $region8
  $region5: #{decoder_model_forward.11} parent=0 // loop_body
    %s15 = ssub.s32 %s10, 1
    %s16 = ssub.s32 %s10, 2
    %s26 = sadd.s32 1, %s19
    %p27 = scmp.ge.s32.totalorder %s26, 1
    %s28 = scalar_select %p27, 0, %s26
    %s29 = sadd.s32 1, %s18
    %s30 = scalar_select %p27, %s29, %s18
    %p31 = scmp.ge.s32.totalorder %s30, 1
    %s32 = scalar_select %p31, 0, %s30
    %s33 = sadd.s32 1, %s17
    %s34 = scalar_select %p31, %s33, %s17
    %p35 = scmp.ge.s32.totalorder %s34, 2
    %s36 = scalar_select %p35, 0, %s34
    %s37 = ssub.s32 %s17, %s36
    %s38 = ssub.s32 %s18, %s32
    %s39 = sor.u32 %s37, %s38
    %p40 = scmp.eq.s32.totalorder %s39, 0
    %s42 = sadd.s32 %s41, 1
    %s43 = scalar_select %p40, %s41, %s42
    %p46 = pneg %p40
    %p47 = scmp.eq.s32.totalorder %s10, 1
    %p48 = por %p46, %p47
    %p49 = scmp.ne.s32.totalorder %s41, %s44
    %p50 = scmp.eq.s32.totalorder %s10, 0
    %p51 = por %p49, %p50
    %p52 = scmp.ne.s32.totalorder %s41, %s44
    %p53 = scmp.eq.s32.totalorder %s15, 1
    %p54 = por %p52, %p53
    %p55 = scmp.ne.s32.totalorder %s44, %s45
    %p56 = scmp.eq.s32.totalorder %s15, 0
    %p57 = por %p55, %p56
    %p58 = scmp.ne.s32.totalorder %s44, %s45
    %p59 = scmp.eq.s32.totalorder %s16, 1
    %p60 = por %p58, %p59
    %p62 = scmp.ne.s32.totalorder %s45, %s61
    %p63 = scmp.eq.s32.totalorder %s16, 0
    %p64 = por %p62, %p63
    %s65 = ssub.s32 %s17, %s36
    %s66 = ssub.s32 %s19, %s28
    %s67 = sor.u32 %s65, %s66
    %p68 = scmp.eq.s32.totalorder %s67, 0
    %s70 = sadd.s32 %s69, 1
    %s71 = scalar_select %p68, %s69, %s70
    %p74 = pneg %p68
    %p75 = scmp.eq.s32.totalorder %s10, 1
    %p76 = por %p74, %p75
    %p77 = scmp.ne.s32.totalorder %s69, %s72
    %p78 = scmp.eq.s32.totalorder %s10, 0
    %p79 = por %p77, %p78
    %p80 = scmp.ne.s32.totalorder %s69, %s72
    %p81 = scmp.eq.s32.totalorder %s15, 1
    %p82 = por %p80, %p81
    %p83 = scmp.ne.s32.totalorder %s72, %s73
    %p84 = scmp.eq.s32.totalorder %s15, 0
    %p85 = por %p83, %p84
    %p86 = scmp.ne.s32.totalorder %s72, %s73
    %p87 = scmp.eq.s32.totalorder %s16, 1
    %p88 = por %p86, %p87
    %p90 = scmp.ne.s32.totalorder %s73, %s89
    %p91 = scmp.eq.s32.totalorder %s16, 0
    %p92 = por %p90, %p91
    %s93 = ssub.s32 %s17, %s36
    %s94 = ssub.s32 %s19, %s28
    %s95 = sor.u32 %s93, %s94
    %p96 = scmp.eq.s32.totalorder %s95, 0
    %s98 = sadd.s32 %s97, 1
    %s99 = scalar_select %p96, %s97, %s98
    %p102 = pneg %p96
    %p103 = scmp.eq.s32.totalorder %s10, 1
    %p104 = por %p102, %p103
    %p105 = scmp.ne.s32.totalorder %s97, %s100
    %p106 = scmp.eq.s32.totalorder %s10, 0
    %p107 = por %p105, %p106
    %p108 = scmp.ne.s32.totalorder %s97, %s100
    %p109 = scmp.eq.s32.totalorder %s15, 1
    %p110 = por %p108, %p109
    %p111 = scmp.ne.s32.totalorder %s100, %s101
    %p112 = scmp.eq.s32.totalorder %s15, 0
    %p113 = por %p111, %p112
    %p114 = scmp.ne.s32.totalorder %s100, %s101
    %p115 = scmp.eq.s32.totalorder %s16, 1
    %p116 = por %p114, %p115
    %p118 = scmp.ne.s32.totalorder %s101, %s117
    %p119 = scmp.eq.s32.totalorder %s16, 0
    %p120 = por %p118, %p119
    %s121 = ssub.s32 %s17, %s36
    %s122 = ssub.s32 %s19, %s28
    %s123 = sor.u32 %s121, %s122
    %p124 = scmp.eq.s32.totalorder %s123, 0
    %s126 = sadd.s32 %s125, 1
    %s127 = scalar_select %p124, %s125, %s126
    %p130 = pneg %p124
    %p131 = scmp.eq.s32.totalorder %s10, 1
    %p132 = por %p130, %p131
    %p133 = scmp.ne.s32.totalorder %s125, %s128
    %p134 = scmp.eq.s32.totalorder %s10, 0
    %p135 = por %p133, %p134
    %p136 = scmp.ne.s32.totalorder %s125, %s128
    %p137 = scmp.eq.s32.totalorder %s15, 1
    %p138 = por %p136, %p137
    %p139 = scmp.ne.s32.totalorder %s128, %s129
    %p140 = scmp.eq.s32.totalorder %s15, 0
    %p141 = por %p139, %p140
    %p142 = scmp.ne.s32.totalorder %s128, %s129
    %p143 = scmp.eq.s32.totalorder %s16, 1
    %p144 = por %p142, %p143
    %p146 = scmp.ne.s32.totalorder %s129, %s145
    %p147 = scmp.eq.s32.totalorder %s16, 0
    %p148 = por %p146, %p147
    %s149 = ssub.s32 %s17, %s36
    %s150 = ssub.s32 %s18, %s32
    %s151 = sor.u32 %s149, %s150
    %p152 = scmp.eq.s32.totalorder %s151, 0
    %s154 = sadd.s32 %s153, 1
    %s155 = scalar_select %p152, %s153, %s154
    %p158 = pneg %p152
    %p159 = scmp.eq.s32.totalorder %s10, 1
    %p160 = por %p158, %p159
    %p161 = scmp.ne.s32.totalorder %s153, %s156
    %p162 = scmp.eq.s32.totalorder %s10, 0
    %p163 = por %p161, %p162
    %p164 = scmp.ne.s32.totalorder %s153, %s156
    %p165 = scmp.eq.s32.totalorder %s15, 1
    %p166 = por %p164, %p165
    %p167 = scmp.ne.s32.totalorder %s156, %s157
    %p168 = scmp.eq.s32.totalorder %s15, 0
    %p169 = por %p167, %p168
    %p170 = scmp.ne.s32.totalorder %s156, %s157
    %p171 = scmp.eq.s32.totalorder %s16, 1
    %p172 = por %p170, %p171
    %p174 = scmp.ne.s32.totalorder %s157, %s173
    %p175 = scmp.eq.s32.totalorder %s16, 0
    %p176 = por %p174, %p175
    %p177 = scmp.le.s32.totalorder 1, %s10
    %p178 = scmp.lt.s32.totalorder %s10, 3
    %p179 = pnand %p177, %p178
    %p180 = pneg %p179
    // Predicated region
    $region9: #{decoder_model_forward.11} parent=5 // pred_check
      _
    $region10: #{decoder_model_forward.11} parent=5 // pred_check_branch
      %182 = sbr.rel (%p179) target = $region12
    $region11: #{decoder_model_forward.11} parent=5 // pred_region
      %s183 = ssub.s32 %s10, 1
    $region12: #{decoder_model_forward.11} parent=5 // pred_fallthru
      _
    %p184 = scmp.lt.s32.totalorder %s10, 2
    // Predicated region
    $region13: #{decoder_model_forward.11} parent=5 // pred_check
      %p185 = pneg %p184
    $region14: #{decoder_model_forward.11} parent=5 // pred_check_branch
      %187 = sbr.rel (%p185) target = $region16
    $region15: #{decoder_model_forward.11} parent=5 // pred_region
      // Predicated region
      $region17: #{decoder_model_forward.11} parent=15 // pred_check
        %p188 = pneg %p51
      $region18: #{decoder_model_forward.11} parent=15 // pred_check_branch
        %190 = sbr.rel (%p188) target = $region20
      $region19: #{decoder_model_forward.11} parent=15 // pred_region
        %p191 = scmp.lt.s32.totalorder %s17, 1
        %s192 = scalar_select %p191, %s17, 1
        %p193 = scmp.lt.s32.totalorder %s18, 0
        %s194 = scalar_select %p193, %s18, 0
        %s195 = sadd.s32 %s194, %s192
        %s196 = smul.addr %s195, 8
        %s197 = scalar_lea.vmem %s0, %s196
      $region20: #{decoder_model_forward.11} parent=15 // pred_fallthru
        _
      // Predicated region
      $region21: #{decoder_model_forward.11} parent=15 // pred_check
        %p198 = pneg %p79
      $region22: #{decoder_model_forward.11} parent=15 // pred_check_branch
        %200 = sbr.rel (%p198) target = $region24
      $region23: #{decoder_model_forward.11} parent=15 // pred_region
        %p201 = scmp.lt.s32.totalorder %s17, 1
        %s202 = scalar_select %p201, %s17, 1
        %p203 = scmp.lt.s32.totalorder %s19, 0
        %s204 = scalar_select %p203, %s19, 0
        %s205 = sadd.s32 %s204, %s202
        %s206 = smul.addr %s205, 8
        %s207 = scalar_lea.vmem %s1, %s206
      $region24: #{decoder_model_forward.11} parent=15 // pred_fallthru
        _
      // Predicated region
      $region25: #{decoder_model_forward.11} parent=15 // pred_check
        %p208 = pneg %p107
      $region26: #{decoder_model_forward.11} parent=15 // pred_check_branch
        %210 = sbr.rel (%p208) target = $region28
      $region27: #{decoder_model_forward.11} parent=15 // pred_region
        %p211 = scmp.lt.s32.totalorder %s17, 1
        %s212 = scalar_select %p211, %s17, 1
        %p213 = scmp.lt.s32.totalorder %s19, 0
        %s214 = scalar_select %p213, %s19, 0
        %s215 = sadd.s32 %s214, %s212
        %s216 = smul.addr %s215, 8
        %s217 = scalar_lea.vmem %s2, %s216
      $region28: #{decoder_model_forward.11} parent=15 // pred_fallthru
        _
      // Predicated region
      $region29: #{decoder_model_forward.11} parent=15 // pred_check
        %p218 = pneg %p135
      $region30: #{decoder_model_forward.11} parent=15 // pred_check_branch
        %220 = sbr.rel (%p218) target = $region32
      $region31: #{decoder_model_forward.11} parent=15 // pred_region
        %p221 = scmp.lt.s32.totalorder %s17, 1
        %s222 = scalar_select %p221, %s17, 1
        %p223 = scmp.lt.s32.totalorder %s19, 0
        %s224 = scalar_select %p223, %s19, 0
        %s225 = sadd.s32 %s224, %s222
        %s226 = scalar_lea.vmem %s3, %s225
      $region32: #{decoder_model_forward.11} parent=15 // pred_fallthru
        _
    $region16: #{decoder_model_forward.11} parent=5 // pred_fallthru
      _
    %p227 = scmp.le.s32.totalorder 1, %s10
    %p228 = scmp.lt.s32.totalorder %s10, 3
    %p229 = pnand %p227, %p228
    %p230 = pneg %p229
    // Predicated region
    $region33: #{decoder_model_forward.11} parent=5 // pred_check
      _
    $region34: #{decoder_model_forward.11} parent=5 // pred_check_branch
      %232 = sbr.rel (%p229) target = $region36
    $region35: #{decoder_model_forward.11} parent=5 // pred_region
      %s233 = ssub.s32 %s10, 1
      %p234 = scmp.lt.s32.totalorder %s20, 1
      %s235 = scalar_select %p234, %s20, 1
      %p236 = scmp.lt.s32.totalorder %s21, 0
      %s237 = scalar_select %p236, %s21, 0
      %s238 = sadd.s32 %s237, %s235
      %s239 = smul.addr %s238, 8
      %s240 = scalar_lea.vmem %s0, %s239
      %p241 = pneg %p57
      %p242 = pneg %p54
      %p243 = scmp.lt.s32.totalorder %s20, 1
      %s244 = scalar_select %p243, %s20, 1
      %p245 = scmp.lt.s32.totalorder %s22, 0
      %s246 = scalar_select %p245, %s22, 0
      %s247 = sadd.s32 %s246, %s244
      %s248 = smul.addr %s247, 8
      %s249 = scalar_lea.vmem %s1, %s248
      %p250 = pneg %p85
      %p251 = pneg %p82
      %p252 = scmp.lt.s32.totalorder %s20, 1
      %s253 = scalar_select %p252, %s20, 1
      %p254 = scmp.lt.s32.totalorder %s22, 0
      %s255 = scalar_select %p254, %s22, 0
      %s256 = sadd.s32 %s255, %s253
      %s257 = smul.addr %s256, 8
      %s258 = scalar_lea.vmem %s2, %s257
      %p259 = pneg %p113
      %p260 = pneg %p110
      %p261 = scmp.lt.s32.totalorder %s20, 1
      %s262 = scalar_select %p261, %s20, 1
      %p263 = scmp.lt.s32.totalorder %s22, 0
      %s264 = scalar_select %p263, %s22, 0
      %s265 = sadd.s32 %s264, %s262
      %s266 = scalar_lea.vmem %s3, %s265
      %p267 = pneg %p141
      %p268 = pneg %p138
      %p269 = pneg %p169
      %p270 = pneg %p166
      %p271 = scmp.lt.s32.totalorder %s20, 1
      %s272 = scalar_select %p271, %s20, 1
      %p273 = scmp.lt.s32.totalorder %s21, 0
      %s274 = scalar_select %p273, %s21, 0
      %s275 = sadd.s32 %s274, %s272
      %s276 = smul.addr %s275, 8
      %s277 = scalar_lea.vmem %s4, %s276
      %p278 = scmp.lt.s32.totalorder %s20, 1
      %s279 = scalar_select %p278, %s20, 1
      %p280 = scmp.lt.s32.totalorder %s21, 0
      %s281 = scalar_select %p280, %s21, 0
      %s282 = sadd.s32 %s281, %s279
      %s283 = smul.addr %s282, 8
      %s284 = scalar_lea.vmem %s0, %s283
      %p285 = scmp.lt.s32.totalorder %s20, 1
      %s286 = scalar_select %p285, %s20, 1
      %p287 = scmp.lt.s32.totalorder %s22, 0
      %s288 = scalar_select %p287, %s22, 0
      %s289 = sadd.s32 %s288, %s286
      %s290 = smul.addr %s289, 8
      %s291 = scalar_lea.vmem %s1, %s290
      %p292 = scmp.lt.s32.totalorder %s20, 1
      %s293 = scalar_select %p292, %s20, 1
      %p294 = scmp.lt.s32.totalorder %s22, 0
      %s295 = scalar_select %p294, %s22, 0
      %s296 = sadd.s32 %s295, %s293
      %s297 = smul.addr %s296, 8
      %s298 = scalar_lea.vmem %s2, %s297
      %p299 = scmp.lt.s32.totalorder %s20, 1
      %s300 = scalar_select %p299, %s20, 1
      %p301 = scmp.lt.s32.totalorder %s22, 0
      %s302 = scalar_select %p301, %s22, 0
      %s303 = sadd.s32 %s302, %s300
      %s304 = scalar_lea.vmem %s3, %s303
      %p305 = scmp.lt.s32.totalorder %s20, 1
      %s306 = scalar_select %p305, %s20, 1
      %p307 = scmp.lt.s32.totalorder %s21, 0
      %s308 = scalar_select %p307, %s21, 0
      %s309 = sadd.s32 %s308, %s306
      %s310 = smul.addr %s309, 8
      %s311 = scalar_lea.vmem %s4, %s310
      %s312 = smul.u32 %s21, 8
      %s313 = smul.u32 %s22, 8
      %p314 = scmp.eq.s32.totalorder %s22, 0
      // Predicated region
      $region37: #{decoder_model_forward.11} parent=35 // pred_check
        %p315 = pneg %p314
      $region38: #{decoder_model_forward.11} parent=35 // pred_check_branch
        %317 = sbr.rel (%p315) target = $region40
      $region39: #{decoder_model_forward.11} parent=35 // pred_region
        %vm318 = vcmask 7168
        %319 = vst.msk [vmem:[#allocation2] sm:$0xff] %vm318, -1e+30
        %320 = vst.msk [vmem:[#allocation2 + $0x8] sm:$0xff] %vm318, -1e+30
        %321 = vst.msk [vmem:[#allocation2 + $0x10] sm:$0xff] %vm318, -1e+30
        %322 = vst.msk [vmem:[#allocation2 + $0x18] sm:$0xff] %vm318, -1e+30
        %323 = vst.msk [vmem:[#allocation3] sm:$0xff] %vm318, 0.0
        %324 = vst.msk [vmem:[#allocation3 + $0x8] sm:$0xff] %vm318, 0.0
        %325 = vst.msk [vmem:[#allocation3 + $0x10] sm:$0xff] %vm318, 0.0
        %326 = vst.msk [vmem:[#allocation3 + $0x18] sm:$0xff] %vm318, 0.0
        %vm327 = vcmask 64512
        %328 = vst.msk [vmem:[#allocation4] sm:$0xff] %vm327, 0.0
        %329 = vst.msk [vmem:[#allocation4 + $0x8] sm:$0xff] %vm327, 0.0
        %330 = vst.msk [vmem:[#allocation4 + $0x10] sm:$0xff] %vm327, 0.0
        %331 = vst.msk [vmem:[#allocation4 + $0x18] sm:$0xff] %vm327, 0.0
      $region40: #{decoder_model_forward.11} parent=35 // pred_fallthru
        _
      %s332 = sadd.s32 %s312, 7
      %p333 = scmp.le.s32.totalorder %s313, %s332
      %s334 = sadd.s32 %s313, 7
      %s335 = ssub.s32 %s312, 8
      %p336 = scmp.ge.s32.totalorder %s334, %s335
      %p337 = pnand %p333, %p336
      %p338 = pneg %p337
      // Predicated region
      $region41: #{decoder_model_forward.11} parent=35 // pred_check
        _
      $region42: #{decoder_model_forward.11} parent=35 // pred_check_branch
        %340 = sbr.rel (%p337) target = $region44
      $region43: #{decoder_model_forward.11} parent=35 // pred_region
        %v341 = vld [vmem:[%s284] sm:$0xff]
        %v342 = vld [vmem:[%s291] sm:$0xff]
        %v343 = vld [vmem:[%s298] sm:$0xff]
        %v344 = vld [vmem:[%s304] sm:$0x1]
        %v345 = vlaneseq
        %v346 = vshrl.u32 %v345, 7
        %v347 = vstv %s312
        %v348 = vadd.s32 %v347, %v346
        %v349 = vlaneseq
        %v350 = vand.u32 %v349, 127
        %v351 = vstv %s313
        %v352 = vadd.s32 %v351, %v350
        %vm353 = vcmp.le.s32.totalorder %v352, %v348
        %vm354 = vcmask 64512
        %v356 = vsel %vm354, %v341, 0
        %v359 = vsel %vm354, %v342, 0
        %361 = vmatpush.xpose.msra.mxu0 0.0
        %362 = vmatpush.xpose.msra.mxu0 0.0
        %363 = vmatpush.xpose.msra.mxu0 0.0
        %364 = vmatpush.xpose.msra.mxu0 0.0
        %365 = vmatpush.xpose.msra.mxu0 0.0
        %366 = vmatpush.xpose.msra.mxu0 0.0
        %367 = vmatpush.xpose.msra.mxu0 0.0
        %368 = vmatpush.xpose.msra.mxu0 0.0
        %369 = vmatpush.xpose.msra.mxu0 0.0
        %370 = vmatpush.xpose.msra.mxu0 0.0
        %371 = vmatpush.xpose.msra.mxu0 0.0
        %372 = vmatpush.xpose.msra.mxu0 0.0
        %373 = vmatpush.xpose.msra.mxu0 0.0
        %374 = vmatpush.xpose.msra.mxu0 0.0
        %375 = vmatpush.xpose.msra.mxu0 0.0
        %376 = vmatpush.xpose.msra.mxu0 %v359
        %377 = vmatmul.f32.gmra.mxu0 %v356
        %v378 = vpop.f32.mrf.mxu0
        %v379 = vadd.f32 0.0, %v378
        %380 = vdwg.mxu0
        %v381 = vmul.f32 %v379, 0.35355338
        %v383 = vperm.slane %v344, 0
        %v385 = vadd.f32 %v381, %v383
        %v386 = vsub.s32 %v348, 2
        %vm387 = vcmp.ge.s32.totalorder %v352, %v386
        %vm388 = vmand %vm353, %vm387
        %v389 = vsel %vm388, %v385, -1e+30
        %v390 = vld [vmem:[#allocation2] sm:$0xff]
        %v391 = vsel %vm354, %v389, -inf
        %392 = vmax.xlane.f32.xlu0 %v391
        %v393 = vpop.xlane.xlu0 %392
        %v394 = vmax.f32 %v390, %v393
        %v395 = vsub.f32 %v390, %v394
        %v396 = vmul.f32 %v395, 1.442695
        %v397 = vpow.pop %v396
        %399 = vset.pattern.permute.xlu0 0
        %400 = vperm.xlu0 %399, %v394
        %v401 = vpop.permute.xlu0 %400
        %v403 = vsub.f32 %v389, %v401
        %v404 = vmul.f32 %v403, 1.442695
        %v405 = vpow.pop %v404
        %v406 = vld [vmem:[#allocation3] sm:$0xff]
        %v407 = vmul.f32 %v397, %v406
        %v408 = vsel %vm354, %v405, 0.0
        %409 = vadd.xlane.f32.xlu0 %v408
        %v410 = vpop.xlane.xlu0 %409
        %v411 = vadd.f32 %v407, %v410
        %vm412 = vcmask 7168
        %413 = vst.msk [vmem:[#allocation3] sm:$0xff] %vm412, %v411
        %v414 = vld [vmem:[#allocation4] sm:$0xff]
        %416 = vset.pattern.permute.xlu0 0
        %417 = vperm.xlu0 %416, %v397
        %v418 = vpop.permute.xlu0 %417
        %v420 = vmul.f32 %v418, %v414
        %v422 = vsel %vm354, %v405, 0
        %424 = vmatpush.msra.mxu0 0.0
        %425 = vmatpush.msra.mxu0 0.0
        %426 = vmatpush.msra.mxu0 0.0
        %427 = vmatpush.msra.mxu0 0.0
        %428 = vmatpush.msra.mxu0 0.0
        %429 = vmatpush.msra.mxu0 0.0
        %430 = vmatpush.msra.mxu0 0.0
        %431 = vmatpush.msra.mxu0 0.0
        %432 = vmatpush.msra.mxu0 0.0
        %433 = vmatpush.msra.mxu0 0.0
        %434 = vmatpush.msra.mxu0 0.0
        %435 = vmatpush.msra.mxu0 0.0
        %436 = vmatpush.msra.mxu0 0.0
        %437 = vmatpush.msra.mxu0 0.0
        %438 = vmatpush.msra.mxu0 0.0
        %439 = vmatpush.msra.mxu0 %v343
        %440 = vmatmul.f32.gmra.mxu0 %v422
        %v441 = vpop.f32.mrf.mxu0
        %v442 = vadd.f32 0.0, %v441
        %443 = vdwg.mxu0
        %v444 = vadd.f32 %v420, %v442
        %445 = vst.msk [vmem:[#allocation4] sm:$0xff] %vm354, %v444
        %446 = vst.msk [vmem:[#allocation2] sm:$0xff] %vm412, %v394
        %447 = vrot.lane.b32.xlu0 %v341, 120
        %v448 = vpop.permute.xlu0 %447
        %449 = vrot.lane.b32.xlu0 %v342, 120
        %v450 = vpop.permute.xlu0 %449
        %v451 = vsel %vm354, %v448, 0
        %v453 = vsel %vm354, %v450, 0
        %455 = vmatpush.xpose.msra.mxu0 0.0
        %456 = vmatpush.xpose.msra.mxu0 0.0
        %457 = vmatpush.xpose.msra.mxu0 0.0
        %458 = vmatpush.xpose.msra.mxu0 0.0
        %459 = vmatpush.xpose.msra.mxu0 0.0
        %460 = vmatpush.xpose.msra.mxu0 0.0
        %461 = vmatpush.xpose.msra.mxu0 0.0
        %462 = vmatpush.xpose.msra.mxu0 0.0
        %463 = vmatpush.xpose.msra.mxu0 0.0
        %464 = vmatpush.xpose.msra.mxu0 0.0
        %465 = vmatpush.xpose.msra.mxu0 0.0
        %466 = vmatpush.xpose.msra.mxu0 0.0
        %467 = vmatpush.xpose.msra.mxu0 0.0
        %468 = vmatpush.xpose.msra.mxu0 0.0
        %469 = vmatpush.xpose.msra.mxu0 0.0
        %470 = vmatpush.xpose.msra.mxu0 %v453
        %471 = vmatmul.f32.gmra.mxu0 %v451
        %v472 = vpop.f32.mrf.mxu0
        %v473 = vadd.f32 0.0, %v472
        %474 = vdwg.mxu0
        %v475 = vmul.f32 %v473, 0.35355338
        %v476 = vadd.f32 %v475, %v383
        %v477 = vsub.s32 %v348, 4
        %vm478 = vcmp.ge.s32.totalorder %v352, %v477
        %vm479 = vmand %vm353, %vm478
        %v480 = vsel %vm479, %v476, -1e+30
        %s481 = scalar_lea.vmem [#allocation2], 8
        %v482 = vld [vmem:[%s481] sm:$0xff]
        %v483 = vsel %vm354, %v480, -inf
        %484 = vmax.xlane.f32.xlu0 %v483
        %v485 = vpop.xlane.xlu0 %484
        %v486 = vmax.f32 %v482, %v485
        %v487 = vsub.f32 %v482, %v486
        %v488 = vmul.f32 %v487, 1.442695
        %v489 = vpow.pop %v488
        %491 = vset.pattern.permute.xlu0 0
        %492 = vperm.xlu0 %491, %v486
        %v493 = vpop.permute.xlu0 %492
        %v495 = vsub.f32 %v480, %v493
        %v496 = vmul.f32 %v495, 1.442695
        %v497 = vpow.pop %v496
        %s498 = scalar_lea.vmem [#allocation3], 8
        %v499 = vld [vmem:[%s498] sm:$0xff]
        %v500 = vmul.f32 %v489, %v499
        %v501 = vsel %vm354, %v497, 0.0
        %502 = vadd.xlane.f32.xlu0 %v501
        %v503 = vpop.xlane.xlu0 %502
        %v504 = vadd.f32 %v500, %v503
        %505 = vst.msk [vmem:[%s498] sm:$0xff] %vm412, %v504
        %s506 = scalar_lea.vmem [#allocation4], 8
        %v507 = vld [vmem:[%s506] sm:$0xff]
        %509 = vset.pattern.permute.xlu0 0
        %510 = vperm.xlu0 %509, %v489
        %v511 = vpop.permute.xlu0 %510
        %v513 = vmul.f32 %v511, %v507
        %515 = vrot.lane.b32.xlu0 %v343, 120
        %v516 = vpop.permute.xlu0 %515
        %v519 = vsel %vm354, %v497, 0
        %521 = vmatpush.msra.mxu0 0.0
        %522 = vmatpush.msra.mxu0 0.0
        %523 = vmatpush.msra.mxu0 0.0
        %524 = vmatpush.msra.mxu0 0.0
        %525 = vmatpush.msra.mxu0 0.0
        %526 = vmatpush.msra.mxu0 0.0
        %527 = vmatpush.msra.mxu0 0.0
        %528 = vmatpush.msra.mxu0 0.0
        %529 = vmatpush.msra.mxu0 0.0
        %530 = vmatpush.msra.mxu0 0.0
        %531 = vmatpush.msra.mxu0 0.0
        %532 = vmatpush.msra.mxu0 0.0
        %533 = vmatpush.msra.mxu0 0.0
        %534 = vmatpush.msra.mxu0 0.0
        %535 = vmatpush.msra.mxu0 0.0
        %536 = vmatpush.msra.mxu0 %v516
        %537 = vmatmul.f32.gmra.mxu0 %v519
        %v538 = vpop.f32.mrf.mxu0
        %v539 = vadd.f32 0.0, %v538
        %540 = vdwg.mxu0
        %v541 = vadd.f32 %v513, %v539
        %542 = vst.msk [vmem:[%s506] sm:$0xff] %vm354, %v541
        %543 = vst.msk [vmem:[%s481] sm:$0xff] %vm412, %v486
        %544 = vrot.lane.b32.xlu0 %v341, 112
        %v545 = vpop.permute.xlu0 %544
        %546 = vrot.lane.b32.xlu0 %v342, 112
        %v547 = vpop.permute.xlu0 %546
        %v548 = vsel %vm354, %v545, 0
        %v550 = vsel %vm354, %v547, 0
        %552 = vmatpush.xpose.msra.mxu0 0.0
        %553 = vmatpush.xpose.msra.mxu0 0.0
        %554 = vmatpush.xpose.msra.mxu0 0.0
        %555 = vmatpush.xpose.msra.mxu0 0.0
        %556 = vmatpush.xpose.msra.mxu0 0.0
        %557 = vmatpush.xpose.msra.mxu0 0.0
        %558 = vmatpush.xpose.msra.mxu0 0.0
        %559 = vmatpush.xpose.msra.mxu0 0.0
        %560 = vmatpush.xpose.msra.mxu0 0.0
        %561 = vmatpush.xpose.msra.mxu0 0.0
        %562 = vmatpush.xpose.msra.mxu0 0.0
        %563 = vmatpush.xpose.msra.mxu0 0.0
        %564 = vmatpush.xpose.msra.mxu0 0.0
        %565 = vmatpush.xpose.msra.mxu0 0.0
        %566 = vmatpush.xpose.msra.mxu0 0.0
        %567 = vmatpush.xpose.msra.mxu0 %v550
        %568 = vmatmul.f32.gmra.mxu0 %v548
        %v569 = vpop.f32.mrf.mxu0
        %v570 = vadd.f32 0.0, %v569
        %571 = vdwg.mxu0
        %v572 = vmul.f32 %v570, 0.35355338
        %v573 = vadd.f32 %v572, %v383
        %v574 = vsub.s32 %v348, 6
        %vm575 = vcmp.ge.s32.totalorder %v352, %v574
        %vm576 = vmand %vm353, %vm575
        %v577 = vsel %vm576, %v573, -1e+30
        %s578 = scalar_lea.vmem [#allocation2], 16
        %v579 = vld [vmem:[%s578] sm:$0xff]
        %v580 = vsel %vm354, %v577, -inf
        %581 = vmax.xlane.f32.xlu0 %v580
        %v582 = vpop.xlane.xlu0 %581
        %v583 = vmax.f32 %v579, %v582
        %v584 = vsub.f32 %v579, %v583
        %v585 = vmul.f32 %v584, 1.442695
        %v586 = vpow.pop %v585
        %588 = vset.pattern.permute.xlu0 0
        %589 = vperm.xlu0 %588, %v583
        %v590 = vpop.permute.xlu0 %589
        %v592 = vsub.f32 %v577, %v590
        %v593 = vmul.f32 %v592, 1.442695
        %v594 = vpow.pop %v593
        %s595 = scalar_lea.vmem [#allocation3], 16
        %v596 = vld [vmem:[%s595] sm:$0xff]
        %v597 = vmul.f32 %v586, %v596
        %v598 = vsel %vm354, %v594, 0.0
        %599 = vadd.xlane.f32.xlu0 %v598
        %v600 = vpop.xlane.xlu0 %599
        %v601 = vadd.f32 %v597, %v600
        %602 = vst.msk [vmem:[%s595] sm:$0xff] %vm412, %v601
        %s603 = scalar_lea.vmem [#allocation4], 16
        %v604 = vld [vmem:[%s603] sm:$0xff]
        %606 = vset.pattern.permute.xlu0 0
        %607 = vperm.xlu0 %606, %v586
        %v608 = vpop.permute.xlu0 %607
        %v610 = vmul.f32 %v608, %v604
        %611 = vrot.lane.b32.xlu0 %v343, 112
        %v612 = vpop.permute.xlu0 %611
        %v615 = vsel %vm354, %v594, 0
        %617 = vmatpush.msra.mxu0 0.0
        %618 = vmatpush.msra.mxu0 0.0
        %619 = vmatpush.msra.mxu0 0.0
        %620 = vmatpush.msra.mxu0 0.0
        %621 = vmatpush.msra.mxu0 0.0
        %622 = vmatpush.msra.mxu0 0.0
        %623 = vmatpush.msra.mxu0 0.0
        %624 = vmatpush.msra.mxu0 0.0
        %625 = vmatpush.msra.mxu0 0.0
        %626 = vmatpush.msra.mxu0 0.0
        %627 = vmatpush.msra.mxu0 0.0
        %628 = vmatpush.msra.mxu0 0.0
        %629 = vmatpush.msra.mxu0 0.0
        %630 = vmatpush.msra.mxu0 0.0
        %631 = vmatpush.msra.mxu0 0.0
        %632 = vmatpush.msra.mxu0 %v612
        %633 = vmatmul.f32.gmra.mxu0 %v615
        %v634 = vpop.f32.mrf.mxu0
        %v635 = vadd.f32 0.0, %v634
        %636 = vdwg.mxu0
        %v637 = vadd.f32 %v610, %v635
        %638 = vst.msk [vmem:[%s603] sm:$0xff] %vm354, %v637
        %639 = vst.msk [vmem:[%s578] sm:$0xff] %vm412, %v583
        %640 = vrot.lane.b32.xlu0 %v341, 104
        %v641 = vpop.permute.xlu0 %640
        %642 = vrot.lane.b32.xlu0 %v342, 104
        %v643 = vpop.permute.xlu0 %642
        %v644 = vsel %vm354, %v641, 0
        %v646 = vsel %vm354, %v643, 0
        %648 = vmatpush.xpose.msra.mxu0 0.0
        %649 = vmatpush.xpose.msra.mxu0 0.0
        %650 = vmatpush.xpose.msra.mxu0 0.0
        %651 = vmatpush.xpose.msra.mxu0 0.0
        %652 = vmatpush.xpose.msra.mxu0 0.0
        %653 = vmatpush.xpose.msra.mxu0 0.0
        %654 = vmatpush.xpose.msra.mxu0 0.0
        %655 = vmatpush.xpose.msra.mxu0 0.0
        %656 = vmatpush.xpose.msra.mxu0 0.0
        %657 = vmatpush.xpose.msra.mxu0 0.0
        %658 = vmatpush.xpose.msra.mxu0 0.0
        %659 = vmatpush.xpose.msra.mxu0 0.0
        %660 = vmatpush.xpose.msra.mxu0 0.0
        %661 = vmatpush.xpose.msra.mxu0 0.0
        %662 = vmatpush.xpose.msra.mxu0 0.0
        %663 = vmatpush.xpose.msra.mxu0 %v646
        %664 = vmatmul.f32.gmra.mxu0 %v644
        %v665 = vpop.f32.mrf.mxu0
        %v666 = vadd.f32 0.0, %v665
        %667 = vdwg.mxu0
        %v668 = vmul.f32 %v666, 0.35355338
        %v669 = vadd.f32 %v668, %v383
        %v670 = vsub.s32 %v348, 8
        %vm671 = vcmp.ge.s32.totalorder %v352, %v670
        %vm672 = vmand %vm353, %vm671
        %v673 = vsel %vm672, %v669, -1e+30
        %s674 = scalar_lea.vmem [#allocation2], 24
        %v675 = vld [vmem:[%s674] sm:$0xff]
        %v676 = vsel %vm354, %v673, -inf
        %677 = vmax.xlane.f32.xlu0 %v676
        %v678 = vpop.xlane.xlu0 %677
        %v679 = vmax.f32 %v675, %v678
        %v680 = vsub.f32 %v675, %v679
        %v681 = vmul.f32 %v680, 1.442695
        %v682 = vpow.pop %v681
        %684 = vset.pattern.permute.xlu0 0
        %685 = vperm.xlu0 %684, %v679
        %v686 = vpop.permute.xlu0 %685
        %v688 = vsub.f32 %v673, %v686
        %v689 = vmul.f32 %v688, 1.442695
        %v690 = vpow.pop %v689
        %s691 = scalar_lea.vmem [#allocation3], 24
        %v692 = vld [vmem:[%s691] sm:$0xff]
        %v693 = vmul.f32 %v682, %v692
        %v694 = vsel %vm354, %v690, 0.0
        %695 = vadd.xlane.f32.xlu0 %v694
        %v696 = vpop.xlane.xlu0 %695
        %v697 = vadd.f32 %v693, %v696
        %698 = vst.msk [vmem:[%s691] sm:$0xff] %vm412, %v697
        %s699 = scalar_lea.vmem [#allocation4], 24
        %v700 = vld [vmem:[%s699] sm:$0xff]
        %702 = vset.pattern.permute.xlu0 0
        %703 = vperm.xlu0 %702, %v682
        %v704 = vpop.permute.xlu0 %703
        %v706 = vmul.f32 %v704, %v700
        %707 = vrot.lane.b32.xlu0 %v343, 104
        %v708 = vpop.permute.xlu0 %707
        %v711 = vsel %vm354, %v690, 0
        %713 = vmatpush.msra.mxu0 0.0
        %714 = vmatpush.msra.mxu0 0.0
        %715 = vmatpush.msra.mxu0 0.0
        %716 = vmatpush.msra.mxu0 0.0
        %717 = vmatpush.msra.mxu0 0.0
        %718 = vmatpush.msra.mxu0 0.0
        %719 = vmatpush.msra.mxu0 0.0
        %720 = vmatpush.msra.mxu0 0.0
        %721 = vmatpush.msra.mxu0 0.0
        %722 = vmatpush.msra.mxu0 0.0
        %723 = vmatpush.msra.mxu0 0.0
        %724 = vmatpush.msra.mxu0 0.0
        %725 = vmatpush.msra.mxu0 0.0
        %726 = vmatpush.msra.mxu0 0.0
        %727 = vmatpush.msra.mxu0 0.0
        %728 = vmatpush.msra.mxu0 %v708
        %729 = vmatmul.f32.gmra.mxu0 %v711
        %v730 = vpop.f32.mrf.mxu0
        %v731 = vadd.f32 0.0, %v730
        %732 = vdwg.mxu0
        %v733 = vadd.f32 %v706, %v731
        %734 = vst.msk [vmem:[%s699] sm:$0xff] %vm354, %v733
        %735 = vst.msk [vmem:[%s674] sm:$0xff] %vm412, %v679
      $region44: #{decoder_model_forward.11} parent=35 // pred_fallthru
        _
      // Predicated region
      $region45: #{decoder_model_forward.11} parent=35 // pred_check
        %p736 = pneg %p314
      $region46: #{decoder_model_forward.11} parent=35 // pred_check_branch
        %738 = sbr.rel (%p736) target = $region48
      $region47: #{decoder_model_forward.11} parent=35 // pred_region
        %v739 = vld [vmem:[#allocation3] sm:$0xff]
        %v740 = vrcp.pop %v739
        %v741 = vld [vmem:[#allocation4] sm:$0xff]
        %743 = vset.pattern.permute.xlu0 0
        %744 = vperm.xlu0 %743, %v740
        %v745 = vpop.permute.xlu0 %744
        %v747 = vmul.f32 %v741, %v745
        %s748 = scalar_lea.vmem [#allocation3], 8
        %v749 = vld [vmem:[%s748] sm:$0xff]
        %v750 = vrcp.pop %v749
        %s751 = scalar_lea.vmem [#allocation4], 8
        %v752 = vld [vmem:[%s751] sm:$0xff]
        %754 = vset.pattern.permute.xlu0 0
        %755 = vperm.xlu0 %754, %v750
        %v756 = vpop.permute.xlu0 %755
        %v758 = vmul.f32 %v752, %v756
        %s759 = scalar_lea.vmem [#allocation3], 16
        %v760 = vld [vmem:[%s759] sm:$0xff]
        %v761 = vrcp.pop %v760
        %s762 = scalar_lea.vmem [#allocation4], 16
        %v763 = vld [vmem:[%s762] sm:$0xff]
        %765 = vset.pattern.permute.xlu0 0
        %766 = vperm.xlu0 %765, %v761
        %v767 = vpop.permute.xlu0 %766
        %v769 = vmul.f32 %v763, %v767
        %s770 = scalar_lea.vmem [#allocation3], 24
        %v771 = vld [vmem:[%s770] sm:$0xff]
        %v772 = vrcp.pop %v771
        %s773 = scalar_lea.vmem [#allocation4], 24
        %v774 = vld [vmem:[%s773] sm:$0xff]
        %776 = vset.pattern.permute.xlu0 0
        %777 = vperm.xlu0 %776, %v772
        %v778 = vpop.permute.xlu0 %777
        %v780 = vmul.f32 %v774, %v778
        %782 = vrot.lane.b32.xlu0 %v758, 8
        %v783 = vpop.permute.xlu0 %782
        %786 = vrot.lane.b32.xlu0 %v769, 16
        %v787 = vpop.permute.xlu0 %786
        %790 = vrot.lane.b32.xlu0 %v780, 24
        %v791 = vpop.permute.xlu0 %790
        %vm793 = vcmask 64512
        %v794 = vsel %vm793, %v747, %v783
        %vm795 = vcmask 130048
        %v796 = vsel %vm795, %v794, %v787
        %vm797 = vcmask 195584
        %v798 = vsel %vm797, %v796, %v791
        %vm799 = vcmask 261120
        %800 = vst.msk [vmem:[%s311] sm:$0xff] %vm799, %v798
      $region48: #{decoder_model_forward.11} parent=35 // pred_fallthru
        _
      %p801 = scmp.lt.s32.totalorder %s20, 1
      %s802 = scalar_select %p801, %s20, 1
      %p803 = scmp.lt.s32.totalorder %s21, 0
      %s804 = scalar_select %p803, %s21, 0
      %s805 = sadd.s32 %s804, %s802
      %s806 = smul.addr %s805, 8
      %s807 = scalar_lea.vmem %s4, %s806
      // Predicated region
      $region49: #{decoder_model_forward.11} parent=35 // pred_check
        %p808 = pneg %p166
      $region50: #{decoder_model_forward.11} parent=35 // pred_check_branch
        %810 = sbr.rel (%p808) target = $region52
      $region51: #{decoder_model_forward.11} parent=35 // pred_region
        _
      $region52: #{decoder_model_forward.11} parent=35 // pred_fallthru
        _
    $region36: #{decoder_model_forward.11} parent=5 // pred_fallthru
      _
    %p811 = scmp.le.s32.totalorder 2, %s10
    // Predicated region
    $region53: #{decoder_model_forward.11} parent=5 // pred_check
      %p812 = pneg %p811
    $region54: #{decoder_model_forward.11} parent=5 // pred_check_branch
      %814 = sbr.rel (%p812) target = $region56
    $region55: #{decoder_model_forward.11} parent=5 // pred_region
      %s815 = ssub.s32 %s10, 2
      // Predicated region
      $region57: #{decoder_model_forward.11} parent=55 // pred_check
        %p816 = pneg %p172
      $region58: #{decoder_model_forward.11} parent=55 // pred_check_branch
        %818 = sbr.rel (%p816) target = $region60
      $region59: #{decoder_model_forward.11} parent=55 // pred_region
        %p819 = scmp.lt.s32.totalorder %s23, 1
        %s820 = scalar_select %p819, %s23, 1
        %p821 = scmp.lt.s32.totalorder %s24, 0
        %s822 = scalar_select %p821, %s24, 0
        %s823 = sadd.s32 %s822, %s820
        %s824 = smul.addr %s823, 8
        %s825 = scalar_lea.vmem %s4, %s824
      $region60: #{decoder_model_forward.11} parent=55 // pred_fallthru
        _
    $region56: #{decoder_model_forward.11} parent=5 // pred_fallthru
      _
  $region6: #{decoder_model_forward.11} parent=0 // loop_footer
    %s14 = sadd.s32 1, %s10
  $region7: #{decoder_model_forward.11} parent=0 // loop_footer_branch
    %9 = sbr.rel target = $region3
  $region8: #{decoder_model_forward.11} parent=0 // loop_exit
    _

</llo_original>
